<compile_context>
chip_gen: v7x
topology: tpu7x:2x2x1
jax: 0.10.0
libtpu: 0.0.40
codegen_flags: <defaults>
</compile_context>

<pallas_src>
import functools

import jax
import jax.numpy as jnp
from jax.experimental import pallas as pl
from jax.experimental.pallas import tpu as pltpu


# ----------------------------------------------------------------------------- kernel
def _bilstm_body(len_ref, embf_ref, embb_ref,
                 wih_ref, whh_ref, b_ref, wlin_ref, blin_ref,
                 out_ref,
                 h_f_ref, h_b_ref, c_f_ref, c_b_ref, gx_ref):
    bb, H = c_f_ref.shape
    H3, H4 = 3 * H, 4 * H
    tt = embf_ref.shape[1] // bb          # timesteps per chunk
    t_blk = pl.program_id(1)
    nt = pl.num_programs(1)
    t_total = nt * tt                     # padded sequence length

    @pl.when(t_blk == 0)
    def _init():
        h_f_ref[...] = jnp.zeros((bb, H), jnp.bfloat16)
        h_b_ref[...] = jnp.zeros((bb, H), jnp.bfloat16)
        c_f_ref[...] = jnp.zeros((bb, H), jnp.float32)
        c_b_ref[...] = jnp.zeros((bb, H), jnp.float32)

    lens = len_ref[...]                   # (bb, 1) int32 valid lengths

    # ---- hoisted validity masks: one vectorised compare per direction per chunk.
    # Kept at (tt, bb, 1); pre-broadcasting to H for all steps would blow vregs at
    # realistic tt*bb*H, so the (bb,1)->(bb,H) broadcast stays inside the select.
    step = jax.lax.broadcasted_iota(jnp.int32, (tt, bb, 1), 0)
    t_f_all = t_blk * tt + step                        # global forward time per step
    mask_f_all = t_f_all < lens[None]                  # (tt, bb, 1) bool
    mask_b_all = (t_total - 1 - t_f_all) < lens[None]  # global backward time per step

    # ---- fused chunk-level input projection (off the serial critical path):
    # ONE (tt*bb, 2E) @ block_diag(wih_f, wih_b) (2E, 8H) bf16 MXU matmul, bias folded.
    # Result parked in VMEM scratch; the unrolled loop loads per-step (bb, 4H) slices so
    # the whole chunk's gate pre-activations never sit live in vregs.
    xf = embf_ref[0]                      # (tt*bb, E) bf16, rows ordered (time, batch)
    xb = embb_ref[0]                      # reversed-time chunk (same ref when nt == 1)
    x_cat = jnp.concatenate([xf, xb], axis=1)          # (tt*bb, 2E)
    gx_ref[...] = (jnp.dot(x_cat, wih_ref[...], preferred_element_type=jnp.float32)
                   + b_ref[...])                       # (tt*bb, 8H) f32

    whh = whh_ref[...]                    # block_diag(whh_f, whh_b): (2H, 8H) bf16

    def lstm_update(g, c):
        # gate columns pre-permuted offline to [i, f, o, g] per direction:
        s = jax.nn.sigmoid(g[:, :H3])                  # one contiguous EUP slab
        i_g, f_g, o_g = s[:, :H], s[:, H:2 * H], s[:, 2 * H:H3]
        g_g = jnp.tanh(g[:, H3:])                      # one contiguous tanh slab
        c_new = f_g * c + i_g * g_g
        h_new = (o_g * jnp.tanh(c_new)).astype(jnp.bfloat16)   # carried bf16 (MXU LHS)
        return h_new, c_new

    h_f = h_f_ref[...]
    h_b = h_b_ref[...]
    c_f = c_f_ref[...]
    c_b = c_b_ref[...]

    # Fully unrolled serial recurrence (tt is a small static constant). Per step, the
    # only ops on the h-dependency chain: one fused (bb,2H)@(2H,8H) matmul, the gate
    # nonlinearities and the elementwise c/h update.
    for i in range(tt):
        h_cat = jnp.concatenate([h_f, h_b], axis=1)    # (bb, 2H) bf16
        g_rec = jnp.dot(h_cat, whh, preferred_element_type=jnp.float32)   # (bb, 8H)
        # fwd gates for in-chunk step i; bwd gates for the mirrored step tt-1-i
        g_f = g_rec[:, :H4] + gx_ref[i * bb:(i + 1) * bb, :H4]
        g_b = g_rec[:, H4:] + gx_ref[(tt - 1 - i) * bb:(tt - i) * bb, H4:]
        hf_new, cf_new = lstm_update(g_f, c_f)
        hb_new, cb_new = lstm_update(g_b, c_b)
        m_f = mask_f_all[i]
        m_b = mask_b_all[i]
        h_f = jnp.where(m_f, hf_new, h_f)
        c_f = jnp.where(m_f, cf_new, c_f)
        h_b = jnp.where(m_b, hb_new, h_b)
        c_b = jnp.where(m_b, cb_new, c_b)

    h_f_ref[...] = h_f
    h_b_ref[...] = h_b
    c_f_ref[...] = c_f
    c_b_ref[...] = c_b

    @pl.when(t_blk == nt - 1)
    def _finalize():
        # TODO(synk): nn.Dropout(p=0.5) is identity at inference time; no-op here.
        cat = jnp.concatenate([h_f, h_b], axis=1).astype(jnp.float32)     # (bb, 2H)
        # N=1 head as a VPU multiply + lane reduce (avoids a worst-fill MXU matmul).
        logits = jnp.sum(cat * wlin_ref[...], axis=1, keepdims=True) + blin_ref[...]
        out_ref[...] = jax.nn.sigmoid(logits)


def _bilstm_kernel_single(len_ref, emb_ref, *rest):
    # nt == 1: both directions consume the single chunk; the embedding is DMA'd once.
    _bilstm_body(len_ref, emb_ref, emb_ref, *rest)


# ------------------------------------------------------------------------ params / prep
def init_params(key, vocab_size, embedding_dim, hidden_dim):
    """PyTorch-layout parameters (gate order [i, f, g, o]), all float32."""
    ks = jax.random.split(key, 11)
    s = 0.1
    H, E = hidden_dim, embedding_dim
    return {
        "embedding": s * jax.random.normal(ks[0], (vocab_size, E), jnp.float32),
        "w_ih_f": s * jax.random.normal(ks[1], (4 * H, E), jnp.float32),
        "w_hh_f": s * jax.random.normal(ks[2], (4 * H, H), jnp.float32),
        "b_ih_f": s * jax.random.normal(ks[3], (4 * H,), jnp.float32),
        "b_hh_f": s * jax.random.normal(ks[4], (4 * H,), jnp.float32),
        "w_ih_b": s * jax.random.normal(ks[5], (4 * H, E), jnp.float32),
        "w_hh_b": s * jax.random.normal(ks[6], (4 * H, H), jnp.float32),
        "b_ih_b": s * jax.random.normal(ks[7], (4 * H,), jnp.float32),
        "b_hh_b": s * jax.random.normal(ks[8], (4 * H,), jnp.float32),
        "w_lin": s * jax.random.normal(ks[9], (1, 2 * H), jnp.float32),
        "b_lin": s * jax.random.normal(ks[10], (1,), jnp.float32),
    }


def _permute_gates(w, axis):
    """[i, f, g, o] (PyTorch) -> [i, f, o, g] so sigmoid covers one contiguous 3H slab."""
    i_, f_, g_, o_ = jnp.split(w, 4, axis=axis)
    return jnp.concatenate([i_, f_, o_, g_], axis=axis)


def prepare_kernel_params(params):
    """Offline weight prep: transpose to (in, 4H), permute gate columns, fold b_ih+b_hh,
    build block-diagonal fused fwd|bwd weights, cast MXU operands/embeddings to bf16."""
    def prep_dir(w_ih, w_hh, b_ih, b_hh):
        wih = _permute_gates(w_ih.T, axis=1)                       # (E, 4H)
        whh = _permute_gates(w_hh.T, axis=1)                       # (H, 4H)
        b = _permute_gates((b_ih + b_hh)[None, :], axis=1)         # (1, 4H)
        return wih, whh, b

    wih_f, whh_f, b_f = prep_dir(params["w_ih_f"], params["w_hh_f"],
                                 params["b_ih_f"], params["b_hh_f"])
    wih_b, whh_b, b_b = prep_dir(params["w_ih_b"], params["w_hh_b"],
                                 params["b_ih_b"], params["b_hh_b"])

    # Block-diagonal fusion: columns are [fwd i,f,o,g | bwd i,f,o,g]; the off-diagonal
    # zero blocks are exact bf16 zeros, so the fused matmuls are bit-equivalent to the
    # two separate per-direction matmuls.
    wih_cat = jax.scipy.linalg.block_diag(wih_f, wih_b).astype(jnp.bfloat16)   # (2E, 8H)
    whh_cat = jax.scipy.linalg.block_diag(whh_f, whh_b).astype(jnp.bfloat16)   # (2H, 8H)
    b_cat = jnp.concatenate([b_f, b_b], axis=1).astype(jnp.float32)            # (1, 8H)

    return {
        "embedding": params["embedding"].astype(jnp.bfloat16),
        "wih_cat": wih_cat, "whh_cat": whh_cat, "b_cat": b_cat,
        "wlin": params["w_lin"].astype(jnp.float32),               # (1, 2H) row vector
        "blin": params["b_lin"].reshape(1, 1).astype(jnp.float32),
    }


# ---------------------------------------------------------------------------- wrapper
@functools.partial(jax.jit,
                   static_argnames=("time_block", "batch_block", "vmem_limit_bytes"))
def bilstm_forward(kparams, x_ids, x_len, *, time_block=None, batch_block=None,
                   vmem_limit_bytes=48 * 1024 * 1024):
    """time_block=None -> whole padded sequence in one chunk (nt==1: single emb DMA).
    batch_block: v7x should use B//2 (or smaller) so megacore shards the parallel axis;
    v5e/v6e keep batch_block=None (largest tile, single TC).
    vmem_limit_bytes: keep <= ~48 MiB on v7x (64 MiB physical); raise toward ~96 MiB on
    v5e/v6e (128 MiB physical) when growing time_block/batch_block."""
    B, T = x_ids.shape
    E = kparams["embedding"].shape[1]
    H = kparams["whh_cat"].shape[0] // 2

    bb = B if batch_block is None else batch_block       # batch tile (parallel axis)
    assert B % bb == 0 and (bb % 8 == 0 or bb == B)
    nb = B // bb

    tt = T if time_block is None else min(time_block, T)  # timesteps per streamed chunk
    T_pad = -(-T // tt) * tt
    nt = T_pad // tt
    # (8,128) sublane rule for the (tt*bb, E) emb blocks; prefer %16 for bf16 at scale.
    assert (tt * bb) % 8 == 0 or nt == 1
    single_chunk = (nt == 1)

    ids = x_ids
    if T_pad != T:
        ids = jnp.pad(ids, ((0, 0), (0, T_pad - T)))      # padded steps are length-masked

    # Gather embeddings directly into the blocked, time-major layout (nb, T_pad*bb, E):
    # no extra HBM transpose/reverse pass over the activation tensor.
    idx = ids.reshape(nb, bb, T_pad).transpose(0, 2, 1).reshape(nb, T_pad * bb)
    emb = kparams["embedding"][idx]                       # bf16, rows ordered (time, batch)

    lens2d = x_len.astype(jnp.int32).reshape(B, 1)

    def const_spec(shape):                                # resident weights: one DMA total
        # (On v7x at scaled E/H these could be single-buffered to save VMEM.)
        return pl.BlockSpec(shape, lambda b, t: (0,) * len(shape))

    emb_spec_f = pl.BlockSpec((1, tt * bb, E), lambda b, t: (b, t, 0))
    emb_spec_b = pl.BlockSpec((1, tt * bb, E), lambda b, t: (b, nt - 1 - t, 0))

    in_specs = [pl.BlockSpec((bb, 1), lambda b, t: (b, 0)),          # lengths
                emb_spec_f]                                          # fwd chunks
    emb_args = [emb]
    if not single_chunk:
        in_specs.append(emb_spec_b)                                  # bwd chunks (same HBM array)
        emb_args.append(emb)
    in_specs += [
        const_spec((2 * E, 8 * H)),   # wih_cat (block-diag fwd|bwd)
        const_spec((2 * H, 8 * H)),   # whh_cat (block-diag fwd|bwd)
        const_spec((1, 8 * H)),       # fused bias
        const_spec((1, 2 * H)),       # wlin row
        const_spec((1, 1)),           # blin
    ]

    grid_spec = pltpu.PrefetchScalarGridSpec(
        num_scalar_prefetch=0,
        grid=(nb, nt),
        in_specs=in_specs,
        out_specs=pl.BlockSpec((bb, 1), lambda b, t: (b, 0)),
        scratch_shapes=[
            pltpu.VMEM((bb, H), jnp.bfloat16),           # h_f carry (bf16 MXU operand)
            pltpu.VMEM((bb, H), jnp.bfloat16),           # h_b carry
            pltpu.VMEM((bb, H), jnp.float32),            # c_f carry
            pltpu.VMEM((bb, H), jnp.float32),            # c_b carry
            pltpu.VMEM((tt * bb, 8 * H), jnp.float32),   # per-chunk gate pre-activations
        ],
    )

    kernel = _bilstm_kernel_single if single_chunk else _bilstm_body

    out = pl.pallas_call(
        kernel,
        out_shape=jax.ShapeDtypeStruct((B, 1), jnp.float32),
        grid_spec=grid_spec,
        compiler_params=pltpu.CompilerParams(
            dimension_semantics=("parallel", "arbitrary"),
            vmem_limit_bytes=vmem_limit_bytes,
        ),
    )(lens2d, *emb_args,
      kparams["wih_cat"], kparams["whh_cat"], kparams["b_cat"],
      kparams["wlin"], kparams["blin"])
    return out[:, 0]                                      # (B,)


# --------------------------------------------------------------------------- reference
def reference_forward(params, x_ids, x_len):
    """Pure-JAX reference of the packed PyTorch BiLSTM (native [i,f,g,o] gate order);
    matmul operands are bf16-rounded and h is carried in bf16 to match kernel numerics."""
    emb = params["embedding"].astype(jnp.bfloat16)[x_ids]    # (B, T, E)
    B = emb.shape[0]
    H = params["w_hh_f"].shape[1]

    def run(xs, w_ih, w_hh, b_ih, b_hh):
        wih = w_ih.T.astype(jnp.bfloat16)
        whh = w_hh.T.astype(jnp.bfloat16)
        b = (b_ih + b_hh).astype(jnp.float32)
        h = jnp.zeros((H,), jnp.bfloat16)
        c = jnp.zeros((H,), jnp.float32)
        for x in xs:
            gates = (jnp.dot(h, whh, preferred_element_type=jnp.float32)
                     + (jnp.dot(x, wih, preferred_element_type=jnp.float32) + b))
            i = jax.nn.sigmoid(gates[0:H])
            f = jax.nn.sigmoid(gates[H:2 * H])
            g = jnp.tanh(gates[2 * H:3 * H])
            o = jax.nn.sigmoid(gates[3 * H:4 * H])
            c = f * c + i * g
            h = (o * jnp.tanh(c)).astype(jnp.bfloat16)
        return h

    outs = []
    for bi in range(B):
        L = int(x_len[bi])
        seq = [emb[bi, t] for t in range(L)]
        h_f = run(seq, params["w_ih_f"], params["w_hh_f"], params["b_ih_f"], params["b_hh_f"])
        h_b = run(seq[::-1], params["w_ih_b"], params["w_hh_b"], params["b_ih_b"], params["b_hh_b"])
        cat = jnp.concatenate([h_f, h_b]).astype(jnp.float32)
        logit = jnp.dot(cat, params["w_lin"][0]) + params["b_lin"][0]
        outs.append(jax.nn.sigmoid(logit))
    return jnp.stack(outs)


# -------------------------------------------------------------------------------- main
if __name__ == "__main__":
    vocab_size, embedding_dim, hidden_dim = 50, 16, 32
    B, T = 8, 8

    key = jax.random.PRNGKey(0)
    k_param, k_ids, k_len = jax.random.split(key, 3)

    params = init_params(k_param, vocab_size, embedding_dim, hidden_dim)
    kparams = prepare_kernel_params(params)               # offline weight prep
    x_ids = jax.random.randint(k_ids, (B, T), 0, vocab_size, dtype=jnp.int32)
    x_len = jax.random.randint(k_len, (B,), 1, T + 1, dtype=jnp.int32)   # lengths in [1, T]

    # Streaming path: two time chunks (dual emb BlockSpecs, reversed index_map for bwd).
    out_stream = jax.block_until_ready(bilstm_forward(kparams, x_ids, x_len, time_block=4))
    # Single-chunk path: whole sequence in one grid step (one emb DMA shared by both dirs).
    out_single = jax.block_until_ready(bilstm_forward(kparams, x_ids, x_len))

    ref = reference_forward(params, x_ids, x_len)
    assert out_stream.shape == (B,)
    # bf16-matched reference; residual differences come from accumulation order and
    # Mosaic EUP vs XLA transcendental approximations.
    assert jnp.allclose(out_stream, ref, atol=5e-4, rtol=5e-4), (out_stream, ref)
    assert jnp.allclose(out_single, ref, atol=5e-4, rtol=5e-4), (out_single, ref)
    assert jnp.allclose(out_single, out_stream, atol=1e-5, rtol=1e-5)

    print("KERNEL_OK")
</pallas_src>

<mosaic_0001>
module attributes {stable_mosaic.version = 11 : i64} {
  func.func @_bilstm_body(%arg0: i32, %arg1: i32, %arg2: memref<8x1xi32, #tpu.memory_space<vmem>>, %arg3: memref<1x32x16xbf16, #tpu.memory_space<vmem>>, %arg4: memref<1x32x16xbf16, #tpu.memory_space<vmem>>, %arg5: memref<32x256xbf16, #tpu.memory_space<vmem>>, %arg6: memref<64x256xbf16, #tpu.memory_space<vmem>>, %arg7: memref<1x256xf32, #tpu.memory_space<vmem>>, %arg8: memref<1x64xf32, #tpu.memory_space<vmem>>, %arg9: memref<1x1xf32, #tpu.memory_space<vmem>>, %arg10: memref<8x1xf32, #tpu.memory_space<vmem>>, %arg11: memref<8x32xbf16, #tpu.memory_space<vmem>>, %arg12: memref<8x32xbf16, #tpu.memory_space<vmem>>, %arg13: memref<8x32xf32, #tpu.memory_space<vmem>>, %arg14: memref<8x32xf32, #tpu.memory_space<vmem>>, %arg15: memref<32x256xf32, #tpu.memory_space<vmem>>) attributes {dimension_semantics = [#tpu.dimension_semantics<parallel>, #tpu.dimension_semantics<arbitrary>], iteration_bounds = array<i64: 1, 2>, scalar_prefetch = 0 : i64, scratch_operands = 5 : i64, tpu.core_type = #tpu.core_type<tc>, window_params = [{transform_indices = @transform_0, window_bounds = array<i64: 8, 1>}, {transform_indices = @transform_1, window_bounds = array<i64: 1, 32, 16>}, {transform_indices = @transform_2, window_bounds = array<i64: 1, 32, 16>}, {pipeline_mode = #tpu.pipeline_mode<synchronous>, transform_indices = @transform_3, window_bounds = array<i64: 32, 256>}, {pipeline_mode = #tpu.pipeline_mode<synchronous>, transform_indices = @transform_4, window_bounds = array<i64: 64, 256>}, {pipeline_mode = #tpu.pipeline_mode<synchronous>, transform_indices = @transform_5, window_bounds = array<i64: 1, 256>}, {pipeline_mode = #tpu.pipeline_mode<synchronous>, transform_indices = @transform_6, window_bounds = array<i64: 1, 64>}, {pipeline_mode = #tpu.pipeline_mode<synchronous>, transform_indices = @transform_7, window_bounds = array<i64: 1, 1>}, {transform_indices = @transform_8, window_bounds = array<i64: 8, 1>}]} {
    %c0_i32 = arith.constant 0 : i32
    %0 = arith.cmpi eq, %arg1, %c0_i32 : i32
    %1 = arith.extui %0 : i1 to i32
    %c0_i32_0 = arith.constant 0 : i32
    %2 = arith.cmpi ne, %1, %c0_i32_0 : i32
    scf.if %2 {
      %cst_57 = arith.constant 0.000000e+00 : bf16
      %271 = vector.broadcast %cst_57 : bf16 to vector<8x32xbf16>
      %c0_58 = arith.constant 0 : index
      %c0_59 = arith.constant 0 : index
      %272 = vector.load %arg11[%c0_58, %c0_59] : memref<8x32xbf16, #tpu.memory_space<vmem>>, vector<8x32xbf16>
      tpu.vector_store %arg11[%c0_58, %c0_59], %271 {strides = array<i32>} : memref<8x32xbf16, #tpu.memory_space<vmem>>, vector<8x32xbf16>,
      %cst_60 = arith.constant 0.000000e+00 : bf16
      %273 = vector.broadcast %cst_60 : bf16 to vector<8x32xbf16>
      %c0_61 = arith.constant 0 : index
      %c0_62 = arith.constant 0 : index
      %274 = vector.load %arg12[%c0_61, %c0_62] : memref<8x32xbf16, #tpu.memory_space<vmem>>, vector<8x32xbf16>
      tpu.vector_store %arg12[%c0_61, %c0_62], %273 {strides = array<i32>} : memref<8x32xbf16, #tpu.memory_space<vmem>>, vector<8x32xbf16>,
      %cst_63 = arith.constant 0.000000e+00 : f32
      %275 = vector.broadcast %cst_63 : f32 to vector<8x32xf32>
      %c0_64 = arith.constant 0 : index
      %c0_65 = arith.constant 0 : index
      %276 = vector.load %arg13[%c0_64, %c0_65] : memref<8x32xf32, #tpu.memory_space<vmem>>, vector<8x32xf32>
      tpu.vector_store %arg13[%c0_64, %c0_65], %275 {strides = array<i32>} : memref<8x32xf32, #tpu.memory_space<vmem>>, vector<8x32xf32>,
      %cst_66 = arith.constant 0.000000e+00 : f32
      %277 = vector.broadcast %cst_66 : f32 to vector<8x32xf32>
      %c0_67 = arith.constant 0 : index
      %c0_68 = arith.constant 0 : index
      %278 = vector.load %arg14[%c0_67, %c0_68] : memref<8x32xf32, #tpu.memory_space<vmem>>, vector<8x32xf32>
      tpu.vector_store %arg14[%c0_67, %c0_68], %277 {strides = array<i32>} : memref<8x32xf32, #tpu.memory_space<vmem>>, vector<8x32xf32>,
    } else {
    }
    %c0 = arith.constant 0 : index
    %c0_1 = arith.constant 0 : index
    %3 = vector.load %arg2[%c0, %c0_1] : memref<8x1xi32, #tpu.memory_space<vmem>>, vector<8x1xi32>
    %4 = tpu.iota {dimensions = array<i32: 0>} : vector<4x8x1xi32>
    %c4_i32 = arith.constant 4 : i32
    %5 = arith.muli %arg1, %c4_i32 : i32
    %6 = vector.broadcast %5 : i32 to vector<4x8x1xi32>
    %7 = arith.addi %6, %4 : vector<4x8x1xi32>
    %8 = vector.shape_cast %3 : vector<8x1xi32> to vector<1x8x1xi32>
    %9 = vector.broadcast %8 : vector<1x8x1xi32> to vector<4x8x1xi32>
    %10 = arith.cmpi slt, %7, %9 : vector<4x8x1xi32>
    %c7_i32 = arith.constant 7 : i32
    %11 = vector.broadcast %c7_i32 : i32 to vector<4x8x1xi32>
    %12 = arith.subi %11, %7 : vector<4x8x1xi32>
    %13 = vector.shape_cast %3 : vector<8x1xi32> to vector<1x8x1xi32>
    %14 = vector.broadcast %13 : vector<1x8x1xi32> to vector<4x8x1xi32>
    %15 = arith.cmpi slt, %12, %14 : vector<4x8x1xi32>
    %c0_2 = arith.constant 0 : index
    %c0_3 = arith.constant 0 : index
    %c0_4 = arith.constant 0 : index
    %16 = vector.load %arg3[%c0_2, %c0_3, %c0_4] : memref<1x32x16xbf16, #tpu.memory_space<vmem>>, vector<1x32x16xbf16>
    %17 = vector.shape_cast %16 : vector<1x32x16xbf16> to vector<32x16xbf16>
    %c0_5 = arith.constant 0 : index
    %c0_6 = arith.constant 0 : index
    %c0_7 = arith.constant 0 : index
    %18 = vector.load %arg4[%c0_5, %c0_6, %c0_7] : memref<1x32x16xbf16, #tpu.memory_space<vmem>>, vector<1x32x16xbf16>
    %19 = vector.shape_cast %18 : vector<1x32x16xbf16> to vector<32x16xbf16>
    %20 = tpu.concatenate %17, %19 in 1 : vector<32x16xbf16>, vector<32x16xbf16> -> vector<32x32xbf16>
    %c0_8 = arith.constant 0 : index
    %c0_9 = arith.constant 0 : index
    %21 = vector.load %arg5[%c0_8, %c0_9] : memref<32x256xbf16, #tpu.memory_space<vmem>>, vector<32x256xbf16>
    %cst = arith.constant dense<0.000000e+00> : vector<32x256xf32>
    %22 = tpu.matmul %20, %21, %cst {dimension_numbers = #tpu.dot_dimension_numbers<[1], [0], [0], [1], [0, 0, 1, 1], [], []>} : vector<32x32xbf16>, vector<32x256xbf16>, vector<32x256xf32> -> vector<32x256xf32>
    %c0_10 = arith.constant 0 : index
    %c0_11 = arith.constant 0 : index
    %23 = vector.load %arg7[%c0_10, %c0_11] : memref<1x256xf32, #tpu.memory_space<vmem>>, vector<1x256xf32>
    %24 = vector.broadcast %23 : vector<1x256xf32> to vector<32x256xf32>
    %25 = arith.addf %22, %24 : vector<32x256xf32>
    %c0_12 = arith.constant 0 : index
    %c0_13 = arith.constant 0 : index
    %26 = vector.load %arg15[%c0_12, %c0_13] : memref<32x256xf32, #tpu.memory_space<vmem>>, vector<32x256xf32>
    tpu.vector_store %arg15[%c0_12, %c0_13], %25 {strides = array<i32>} : memref<32x256xf32, #tpu.memory_space<vmem>>, vector<32x256xf32>,
    %c0_14 = arith.constant 0 : index
    %c0_15 = arith.constant 0 : index
    %27 = vector.load %arg6[%c0_14, %c0_15] : memref<64x256xbf16, #tpu.memory_space<vmem>>, vector<64x256xbf16>
    %c0_16 = arith.constant 0 : index
    %c0_17 = arith.constant 0 : index
    %28 = vector.load %arg11[%c0_16, %c0_17] : memref<8x32xbf16, #tpu.memory_space<vmem>>, vector<8x32xbf16>
    %c0_18 = arith.constant 0 : index
    %c0_19 = arith.constant 0 : index
    %29 = vector.load %arg12[%c0_18, %c0_19] : memref<8x32xbf16, #tpu.memory_space<vmem>>, vector<8x32xbf16>
    %c0_20 = arith.constant 0 : index
    %c0_21 = arith.constant 0 : index
    %30 = vector.load %arg13[%c0_20, %c0_21] : memref<8x32xf32, #tpu.memory_space<vmem>>, vector<8x32xf32>
    %c0_22 = arith.constant 0 : index
    %c0_23 = arith.constant 0 : index
    %31 = vector.load %arg14[%c0_22, %c0_23] : memref<8x32xf32, #tpu.memory_space<vmem>>, vector<8x32xf32>
    %32 = tpu.concatenate %28, %29 in 1 : vector<8x32xbf16>, vector<8x32xbf16> -> vector<8x64xbf16>
    %cst_24 = arith.constant dense<0.000000e+00> : vector<8x256xf32>
    %33 = tpu.matmul %32, %27, %cst_24 {dimension_numbers = #tpu.dot_dimension_numbers<[1], [0], [0], [1], [0, 0, 1, 1], [], []>} : vector<8x64xbf16>, vector<64x256xbf16>, vector<8x256xf32> -> vector<8x256xf32>
    %34 = vector.extract_strided_slice %33 {offsets = [0, 0], sizes = [8, 128], strides = [1, 1]} : vector<8x256xf32> to vector<8x128xf32>
    %c0_25 = arith.constant 0 : index
    %c0_26 = arith.constant 0 : index
    %35 = vector.load %arg15[%c0_25, %c0_26] : memref<32x256xf32, #tpu.memory_space<vmem>>, vector<8x128xf32>
    %36 = arith.addf %34, %35 : vector<8x128xf32>
    %37 = vector.extract_strided_slice %33 {offsets = [0, 128], sizes = [8, 128], strides = [1, 1]} : vector<8x256xf32> to vector<8x128xf32>
    %c24 = arith.constant 24 : index
    %c128 = arith.constant 128 : index
    %38 = vector.load %arg15[%c24, %c128] : memref<32x256xf32, #tpu.memory_space<vmem>>, vector<8x128xf32>
    %39 = arith.addf %37, %38 : vector<8x128xf32>
    %40 = vector.extract_strided_slice %36 {offsets = [0, 0], sizes = [8, 96], strides = [1, 1]} : vector<8x128xf32> to vector<8x96xf32>
    %41 = arith.negf %40 : vector<8x96xf32>
    %42 = math.exp %41 : vector<8x96xf32>
    %cst_27 = arith.constant 1.000000e+00 : f32
    %43 = vector.broadcast %cst_27 : f32 to vector<8x96xf32>
    %44 = arith.addf %43, %42 : vector<8x96xf32>
    %45 = arith.divf %43, %44 : vector<8x96xf32>
    %46 = vector.extract_strided_slice %45 {offsets = [0, 0], sizes = [8, 32], strides = [1, 1]} : vector<8x96xf32> to vector<8x32xf32>
    %47 = vector.extract_strided_slice %45 {offsets = [0, 32], sizes = [8, 32], strides = [1, 1]} : vector<8x96xf32> to vector<8x32xf32>
    %48 = vector.extract_strided_slice %45 {offsets = [0, 64], sizes = [8, 32], strides = [1, 1]} : vector<8x96xf32> to vector<8x32xf32>
    %49 = vector.extract_strided_slice %36 {offsets = [0, 96], sizes = [8, 32], strides = [1, 1]} : vector<8x128xf32> to vector<8x32xf32>
    %50 = math.tanh %49 : vector<8x32xf32>
    %51 = arith.mulf %47, %30 : vector<8x32xf32>
    %52 = arith.mulf %46, %50 : vector<8x32xf32>
    %53 = arith.addf %51, %52 : vector<8x32xf32>
    %54 = math.tanh %53 : vector<8x32xf32>
    %55 = arith.mulf %48, %54 : vector<8x32xf32>
    %56 = arith.truncf %55 : vector<8x32xf32> to vector<8x32xbf16>
    %57 = vector.extract_strided_slice %39 {offsets = [0, 0], sizes = [8, 96], strides = [1, 1]} : vector<8x128xf32> to vector<8x96xf32>
    %58 = arith.negf %57 : vector<8x96xf32>
    %59 = math.exp %58 : vector<8x96xf32>
    %cst_28 = arith.constant 1.000000e+00 : f32
    %60 = vector.broadcast %cst_28 : f32 to vector<8x96xf32>
    %61 = arith.addf %60, %59 : vector<8x96xf32>
    %62 = arith.divf %60, %61 : vector<8x96xf32>
    %63 = vector.extract_strided_slice %62 {offsets = [0, 0], sizes = [8, 32], strides = [1, 1]} : vector<8x96xf32> to vector<8x32xf32>
    %64 = vector.extract_strided_slice %62 {offsets = [0, 32], sizes = [8, 32], strides = [1, 1]} : vector<8x96xf32> to vector<8x32xf32>
    %65 = vector.extract_strided_slice %62 {offsets = [0, 64], sizes = [8, 32], strides = [1, 1]} : vector<8x96xf32> to vector<8x32xf32>
    %66 = vector.extract_strided_slice %39 {offsets = [0, 96], sizes = [8, 32], strides = [1, 1]} : vector<8x128xf32> to vector<8x32xf32>
    %67 = math.tanh %66 : vector<8x32xf32>
    %68 = arith.mulf %64, %31 : vector<8x32xf32>
    %69 = arith.mulf %63, %67 : vector<8x32xf32>
    %70 = arith.addf %68, %69 : vector<8x32xf32>
    %71 = math.tanh %70 : vector<8x32xf32>
    %72 = arith.mulf %65, %71 : vector<8x32xf32>
    %73 = arith.truncf %72 : vector<8x32xf32> to vector<8x32xbf16>
    %74 = vector.extract_strided_slice %10 {offsets = [0, 0, 0], sizes = [1, 8, 1], strides = [1, 1, 1]} : vector<4x8x1xi1> to vector<1x8x1xi1>
    %75 = vector.shape_cast %74 : vector<1x8x1xi1> to vector<8x1xi1>
    %76 = vector.extract_strided_slice %15 {offsets = [0, 0, 0], sizes = [1, 8, 1], strides = [1, 1, 1]} : vector<4x8x1xi1> to vector<1x8x1xi1>
    %77 = vector.shape_cast %76 : vector<1x8x1xi1> to vector<8x1xi1>
    %78 = vector.shape_cast %75 : vector<8x1xi1> to vector<8x1xi1>
    %79 = vector.broadcast %78 : vector<8x1xi1> to vector<8x32xi1>
    %80 = arith.select %79, %56, %28 : vector<8x32xi1>, vector<8x32xbf16>
    %81 = vector.shape_cast %75 : vector<8x1xi1> to vector<8x1xi1>
    %82 = vector.broadcast %81 : vector<8x1xi1> to vector<8x32xi1>
    %83 = arith.select %82, %53, %30 : vector<8x32xi1>, vector<8x32xf32>
    %84 = vector.shape_cast %77 : vector<8x1xi1> to vector<8x1xi1>
    %85 = vector.broadcast %84 : vector<8x1xi1> to vector<8x32xi1>
    %86 = arith.select %85, %73, %29 : vector<8x32xi1>, vector<8x32xbf16>
    %87 = vector.shape_cast %77 : vector<8x1xi1> to vector<8x1xi1>
    %88 = vector.broadcast %87 : vector<8x1xi1> to vector<8x32xi1>
    %89 = arith.select %88, %70, %31 : vector<8x32xi1>, vector<8x32xf32>
    %90 = tpu.concatenate %80, %86 in 1 : vector<8x32xbf16>, vector<8x32xbf16> -> vector<8x64xbf16>
    %cst_29 = arith.constant dense<0.000000e+00> : vector<8x256xf32>
    %91 = tpu.matmul %90, %27, %cst_29 {dimension_numbers = #tpu.dot_dimension_numbers<[1], [0], [0], [1], [0, 0, 1, 1], [], []>} : vector<8x64xbf16>, vector<64x256xbf16>, vector<8x256xf32> -> vector<8x256xf32>
    %92 = vector.extract_strided_slice %91 {offsets = [0, 0], sizes = [8, 128], strides = [1, 1]} : vector<8x256xf32> to vector<8x128xf32>
    %c8 = arith.constant 8 : index
    %c0_30 = arith.constant 0 : index
    %93 = vector.load %arg15[%c8, %c0_30] : memref<32x256xf32, #tpu.memory_space<vmem>>, vector<8x128xf32>
    %94 = arith.addf %92, %93 : vector<8x128xf32>
    %95 = vector.extract_strided_slice %91 {offsets = [0, 128], sizes = [8, 128], strides = [1, 1]} : vector<8x256xf32> to vector<8x128xf32>
    %c16 = arith.constant 16 : index
    %c128_31 = arith.constant 128 : index
    %96 = vector.load %arg15[%c16, %c128_31] : memref<32x256xf32, #tpu.memory_space<vmem>>, vector<8x128xf32>
    %97 = arith.addf %95, %96 : vector<8x128xf32>
    %98 = vector.extract_strided_slice %94 {offsets = [0, 0], sizes = [8, 96], strides = [1, 1]} : vector<8x128xf32> to vector<8x96xf32>
    %99 = arith.negf %98 : vector<8x96xf32>
    %100 = math.exp %99 : vector<8x96xf32>
    %cst_32 = arith.constant 1.000000e+00 : f32
    %101 = vector.broadcast %cst_32 : f32 to vector<8x96xf32>
    %102 = arith.addf %101, %100 : vector<8x96xf32>
    %103 = arith.divf %101, %102 : vector<8x96xf32>
    %104 = vector.extract_strided_slice %103 {offsets = [0, 0], sizes = [8, 32], strides = [1, 1]} : vector<8x96xf32> to vector<8x32xf32>
    %105 = vector.extract_strided_slice %103 {offsets = [0, 32], sizes = [8, 32], strides = [1, 1]} : vector<8x96xf32> to vector<8x32xf32>
    %106 = vector.extract_strided_slice %103 {offsets = [0, 64], sizes = [8, 32], strides = [1, 1]} : vector<8x96xf32> to vector<8x32xf32>
    %107 = vector.extract_strided_slice %94 {offsets = [0, 96], sizes = [8, 32], strides = [1, 1]} : vector<8x128xf32> to vector<8x32xf32>
    %108 = math.tanh %107 : vector<8x32xf32>
    %109 = arith.mulf %105, %83 : vector<8x32xf32>
    %110 = arith.mulf %104, %108 : vector<8x32xf32>
    %111 = arith.addf %109, %110 : vector<8x32xf32>
    %112 = math.tanh %111 : vector<8x32xf32>
    %113 = arith.mulf %106, %112 : vector<8x32xf32>
    %114 = arith.truncf %113 : vector<8x32xf32> to vector<8x32xbf16>
    %115 = vector.extract_strided_slice %97 {offsets = [0, 0], sizes = [8, 96], strides = [1, 1]} : vector<8x128xf32> to vector<8x96xf32>
    %116 = arith.negf %115 : vector<8x96xf32>
    %117 = math.exp %116 : vector<8x96xf32>
    %cst_33 = arith.constant 1.000000e+00 : f32
    %118 = vector.broadcast %cst_33 : f32 to vector<8x96xf32>
    %119 = arith.addf %118, %117 : vector<8x96xf32>
    %120 = arith.divf %118, %119 : vector<8x96xf32>
    %121 = vector.extract_strided_slice %120 {offsets = [0, 0], sizes = [8, 32], strides = [1, 1]} : vector<8x96xf32> to vector<8x32xf32>
    %122 = vector.extract_strided_slice %120 {offsets = [0, 32], sizes = [8, 32], strides = [1, 1]} : vector<8x96xf32> to vector<8x32xf32>
    %123 = vector.extract_strided_slice %120 {offsets = [0, 64], sizes = [8, 32], strides = [1, 1]} : vector<8x96xf32> to vector<8x32xf32>
    %124 = vector.extract_strided_slice %97 {offsets = [0, 96], sizes = [8, 32], strides = [1, 1]} : vector<8x128xf32> to vector<8x32xf32>
    %125 = math.tanh %124 : vector<8x32xf32>
    %126 = arith.mulf %122, %89 : vector<8x32xf32>
    %127 = arith.mulf %121, %125 : vector<8x32xf32>
    %128 = arith.addf %126, %127 : vector<8x32xf32>
    %129 = math.tanh %128 : vector<8x32xf32>
    %130 = arith.mulf %123, %129 : vector<8x32xf32>
    %131 = arith.truncf %130 : vector<8x32xf32> to vector<8x32xbf16>
    %132 = vector.extract_strided_slice %10 {offsets = [1, 0, 0], sizes = [1, 8, 1], strides = [1, 1, 1]} : vector<4x8x1xi1> to vector<1x8x1xi1>
    %133 = vector.shape_cast %132 : vector<1x8x1xi1> to vector<8x1xi1>
    %134 = vector.extract_strided_slice %15 {offsets = [1, 0, 0], sizes = [1, 8, 1], strides = [1, 1, 1]} : vector<4x8x1xi1> to vector<1x8x1xi1>
    %135 = vector.shape_cast %134 : vector<1x8x1xi1> to vector<8x1xi1>
    %136 = vector.shape_cast %133 : vector<8x1xi1> to vector<8x1xi1>
    %137 = vector.broadcast %136 : vector<8x1xi1> to vector<8x32xi1>
    %138 = arith.select %137, %114, %80 : vector<8x32xi1>, vector<8x32xbf16>
    %139 = vector.shape_cast %133 : vector<8x1xi1> to vector<8x1xi1>
    %140 = vector.broadcast %139 : vector<8x1xi1> to vector<8x32xi1>
    %141 = arith.select %140, %111, %83 : vector<8x32xi1>, vector<8x32xf32>
    %142 = vector.shape_cast %135 : vector<8x1xi1> to vector<8x1xi1>
    %143 = vector.broadcast %142 : vector<8x1xi1> to vector<8x32xi1>
    %144 = arith.select %143, %131, %86 : vector<8x32xi1>, vector<8x32xbf16>
    %145 = vector.shape_cast %135 : vector<8x1xi1> to vector<8x1xi1>
    %146 = vector.broadcast %145 : vector<8x1xi1> to vector<8x32xi1>
    %147 = arith.select %146, %128, %89 : vector<8x32xi1>, vector<8x32xf32>
    %148 = tpu.concatenate %138, %144 in 1 : vector<8x32xbf16>, vector<8x32xbf16> -> vector<8x64xbf16>
    %cst_34 = arith.constant dense<0.000000e+00> : vector<8x256xf32>
    %149 = tpu.matmul %148, %27, %cst_34 {dimension_numbers = #tpu.dot_dimension_numbers<[1], [0], [0], [1], [0, 0, 1, 1], [], []>} : vector<8x64xbf16>, vector<64x256xbf16>, vector<8x256xf32> -> vector<8x256xf32>
    %150 = vector.extract_strided_slice %149 {offsets = [0, 0], sizes = [8, 128], strides = [1, 1]} : vector<8x256xf32> to vector<8x128xf32>
    %c16_35 = arith.constant 16 : index
    %c0_36 = arith.constant 0 : index
    %151 = vector.load %arg15[%c16_35, %c0_36] : memref<32x256xf32, #tpu.memory_space<vmem>>, vector<8x128xf32>
    %152 = arith.addf %150, %151 : vector<8x128xf32>
    %153 = vector.extract_strided_slice %149 {offsets = [0, 128], sizes = [8, 128], strides = [1, 1]} : vector<8x256xf32> to vector<8x128xf32>
    %c8_37 = arith.constant 8 : index
    %c128_38 = arith.constant 128 : index
    %154 = vector.load %arg15[%c8_37, %c128_38] : memref<32x256xf32, #tpu.memory_space<vmem>>, vector<8x128xf32>
    %155 = arith.addf %153, %154 : vector<8x128xf32>
    %156 = vector.extract_strided_slice %152 {offsets = [0, 0], sizes = [8, 96], strides = [1, 1]} : vector<8x128xf32> to vector<8x96xf32>
    %157 = arith.negf %156 : vector<8x96xf32>
    %158 = math.exp %157 : vector<8x96xf32>
    %cst_39 = arith.constant 1.000000e+00 : f32
    %159 = vector.broadcast %cst_39 : f32 to vector<8x96xf32>
    %160 = arith.addf %159, %158 : vector<8x96xf32>
    %161 = arith.divf %159, %160 : vector<8x96xf32>
    %162 = vector.extract_strided_slice %161 {offsets = [0, 0], sizes = [8, 32], strides = [1, 1]} : vector<8x96xf32> to vector<8x32xf32>
    %163 = vector.extract_strided_slice %161 {offsets = [0, 32], sizes = [8, 32], strides = [1, 1]} : vector<8x96xf32> to vector<8x32xf32>
    %164 = vector.extract_strided_slice %161 {offsets = [0, 64], sizes = [8, 32], strides = [1, 1]} : vector<8x96xf32> to vector<8x32xf32>
    %165 = vector.extract_strided_slice %152 {offsets = [0, 96], sizes = [8, 32], strides = [1, 1]} : vector<8x128xf32> to vector<8x32xf32>
    %166 = math.tanh %165 : vector<8x32xf32>
    %167 = arith.mulf %163, %141 : vector<8x32xf32>
    %168 = arith.mulf %162, %166 : vector<8x32xf32>
    %169 = arith.addf %167, %168 : vector<8x32xf32>
    %170 = math.tanh %169 : vector<8x32xf32>
    %171 = arith.mulf %164, %170 : vector<8x32xf32>
    %172 = arith.truncf %171 : vector<8x32xf32> to vector<8x32xbf16>
    %173 = vector.extract_strided_slice %155 {offsets = [0, 0], sizes = [8, 96], strides = [1, 1]} : vector<8x128xf32> to vector<8x96xf32>
    %174 = arith.negf %173 : vector<8x96xf32>
    %175 = math.exp %174 : vector<8x96xf32>
    %cst_40 = arith.constant 1.000000e+00 : f32
    %176 = vector.broadcast %cst_40 : f32 to vector<8x96xf32>
    %177 = arith.addf %176, %175 : vector<8x96xf32>
    %178 = arith.divf %176, %177 : vector<8x96xf32>
    %179 = vector.extract_strided_slice %178 {offsets = [0, 0], sizes = [8, 32], strides = [1, 1]} : vector<8x96xf32> to vector<8x32xf32>
    %180 = vector.extract_strided_slice %178 {offsets = [0, 32], sizes = [8, 32], strides = [1, 1]} : vector<8x96xf32> to vector<8x32xf32>
    %181 = vector.extract_strided_slice %178 {offsets = [0, 64], sizes = [8, 32], strides = [1, 1]} : vector<8x96xf32> to vector<8x32xf32>
    %182 = vector.extract_strided_slice %155 {offsets = [0, 96], sizes = [8, 32], strides = [1, 1]} : vector<8x128xf32> to vector<8x32xf32>
    %183 = math.tanh %182 : vector<8x32xf32>
    %184 = arith.mulf %180, %147 : vector<8x32xf32>
    %185 = arith.mulf %179, %183 : vector<8x32xf32>
    %186 = arith.addf %184, %185 : vector<8x32xf32>
    %187 = math.tanh %186 : vector<8x32xf32>
    %188 = arith.mulf %181, %187 : vector<8x32xf32>
    %189 = arith.truncf %188 : vector<8x32xf32> to vector<8x32xbf16>
    %190 = vector.extract_strided_slice %10 {offsets = [2, 0, 0], sizes = [1, 8, 1], strides = [1, 1, 1]} : vector<4x8x1xi1> to vector<1x8x1xi1>
    %191 = vector.shape_cast %190 : vector<1x8x1xi1> to vector<8x1xi1>
    %192 = vector.extract_strided_slice %15 {offsets = [2, 0, 0], sizes = [1, 8, 1], strides = [1, 1, 1]} : vector<4x8x1xi1> to vector<1x8x1xi1>
    %193 = vector.shape_cast %192 : vector<1x8x1xi1> to vector<8x1xi1>
    %194 = vector.shape_cast %191 : vector<8x1xi1> to vector<8x1xi1>
    %195 = vector.broadcast %194 : vector<8x1xi1> to vector<8x32xi1>
    %196 = arith.select %195, %172, %138 : vector<8x32xi1>, vector<8x32xbf16>
    %197 = vector.shape_cast %191 : vector<8x1xi1> to vector<8x1xi1>
    %198 = vector.broadcast %197 : vector<8x1xi1> to vector<8x32xi1>
    %199 = arith.select %198, %169, %141 : vector<8x32xi1>, vector<8x32xf32>
    %200 = vector.shape_cast %193 : vector<8x1xi1> to vector<8x1xi1>
    %201 = vector.broadcast %200 : vector<8x1xi1> to vector<8x32xi1>
    %202 = arith.select %201, %189, %144 : vector<8x32xi1>, vector<8x32xbf16>
    %203 = vector.shape_cast %193 : vector<8x1xi1> to vector<8x1xi1>
    %204 = vector.broadcast %203 : vector<8x1xi1> to vector<8x32xi1>
    %205 = arith.select %204, %186, %147 : vector<8x32xi1>, vector<8x32xf32>
    %206 = tpu.concatenate %196, %202 in 1 : vector<8x32xbf16>, vector<8x32xbf16> -> vector<8x64xbf16>
    %cst_41 = arith.constant dense<0.000000e+00> : vector<8x256xf32>
    %207 = tpu.matmul %206, %27, %cst_41 {dimension_numbers = #tpu.dot_dimension_numbers<[1], [0], [0], [1], [0, 0, 1, 1], [], []>} : vector<8x64xbf16>, vector<64x256xbf16>, vector<8x256xf32> -> vector<8x256xf32>
    %208 = vector.extract_strided_slice %207 {offsets = [0, 0], sizes = [8, 128], strides = [1, 1]} : vector<8x256xf32> to vector<8x128xf32>
    %c24_42 = arith.constant 24 : index
    %c0_43 = arith.constant 0 : index
    %209 = vector.load %arg15[%c24_42, %c0_43] : memref<32x256xf32, #tpu.memory_space<vmem>>, vector<8x128xf32>
    %210 = arith.addf %208, %209 : vector<8x128xf32>
    %211 = vector.extract_strided_slice %207 {offsets = [0, 128], sizes = [8, 128], strides = [1, 1]} : vector<8x256xf32> to vector<8x128xf32>
    %c0_44 = arith.constant 0 : index
    %c128_45 = arith.constant 128 : index
    %212 = vector.load %arg15[%c0_44, %c128_45] : memref<32x256xf32, #tpu.memory_space<vmem>>, vector<8x128xf32>
    %213 = arith.addf %211, %212 : vector<8x128xf32>
    %214 = vector.extract_strided_slice %210 {offsets = [0, 0], sizes = [8, 96], strides = [1, 1]} : vector<8x128xf32> to vector<8x96xf32>
    %215 = arith.negf %214 : vector<8x96xf32>
    %216 = math.exp %215 : vector<8x96xf32>
    %cst_46 = arith.constant 1.000000e+00 : f32
    %217 = vector.broadcast %cst_46 : f32 to vector<8x96xf32>
    %218 = arith.addf %217, %216 : vector<8x96xf32>
    %219 = arith.divf %217, %218 : vector<8x96xf32>
    %220 = vector.extract_strided_slice %219 {offsets = [0, 0], sizes = [8, 32], strides = [1, 1]} : vector<8x96xf32> to vector<8x32xf32>
    %221 = vector.extract_strided_slice %219 {offsets = [0, 32], sizes = [8, 32], strides = [1, 1]} : vector<8x96xf32> to vector<8x32xf32>
    %222 = vector.extract_strided_slice %219 {offsets = [0, 64], sizes = [8, 32], strides = [1, 1]} : vector<8x96xf32> to vector<8x32xf32>
    %223 = vector.extract_strided_slice %210 {offsets = [0, 96], sizes = [8, 32], strides = [1, 1]} : vector<8x128xf32> to vector<8x32xf32>
    %224 = math.tanh %223 : vector<8x32xf32>
    %225 = arith.mulf %221, %199 : vector<8x32xf32>
    %226 = arith.mulf %220, %224 : vector<8x32xf32>
    %227 = arith.addf %225, %226 : vector<8x32xf32>
    %228 = math.tanh %227 : vector<8x32xf32>
    %229 = arith.mulf %222, %228 : vector<8x32xf32>
    %230 = arith.truncf %229 : vector<8x32xf32> to vector<8x32xbf16>
    %231 = vector.extract_strided_slice %213 {offsets = [0, 0], sizes = [8, 96], strides = [1, 1]} : vector<8x128xf32> to vector<8x96xf32>
    %232 = arith.negf %231 : vector<8x96xf32>
    %233 = math.exp %232 : vector<8x96xf32>
    %cst_47 = arith.constant 1.000000e+00 : f32
    %234 = vector.broadcast %cst_47 : f32 to vector<8x96xf32>
    %235 = arith.addf %234, %233 : vector<8x96xf32>
    %236 = arith.divf %234, %235 : vector<8x96xf32>
    %237 = vector.extract_strided_slice %236 {offsets = [0, 0], sizes = [8, 32], strides = [1, 1]} : vector<8x96xf32> to vector<8x32xf32>
    %238 = vector.extract_strided_slice %236 {offsets = [0, 32], sizes = [8, 32], strides = [1, 1]} : vector<8x96xf32> to vector<8x32xf32>
    %239 = vector.extract_strided_slice %236 {offsets = [0, 64], sizes = [8, 32], strides = [1, 1]} : vector<8x96xf32> to vector<8x32xf32>
    %240 = vector.extract_strided_slice %213 {offsets = [0, 96], sizes = [8, 32], strides = [1, 1]} : vector<8x128xf32> to vector<8x32xf32>
    %241 = math.tanh %240 : vector<8x32xf32>
    %242 = arith.mulf %238, %205 : vector<8x32xf32>
    %243 = arith.mulf %237, %241 : vector<8x32xf32>
    %244 = arith.addf %242, %243 : vector<8x32xf32>
    %245 = math.tanh %244 : vector<8x32xf32>
    %246 = arith.mulf %239, %245 : vector<8x32xf32>
    %247 = arith.truncf %246 : vector<8x32xf32> to vector<8x32xbf16>
    %248 = vector.extract_strided_slice %10 {offsets = [3, 0, 0], sizes = [1, 8, 1], strides = [1, 1, 1]} : vector<4x8x1xi1> to vector<1x8x1xi1>
    %249 = vector.shape_cast %248 : vector<1x8x1xi1> to vector<8x1xi1>
    %250 = vector.extract_strided_slice %15 {offsets = [3, 0, 0], sizes = [1, 8, 1], strides = [1, 1, 1]} : vector<4x8x1xi1> to vector<1x8x1xi1>
    %251 = vector.shape_cast %250 : vector<1x8x1xi1> to vector<8x1xi1>
    %252 = vector.shape_cast %249 : vector<8x1xi1> to vector<8x1xi1>
    %253 = vector.broadcast %252 : vector<8x1xi1> to vector<8x32xi1>
    %254 = arith.select %253, %230, %196 : vector<8x32xi1>, vector<8x32xbf16>
    %255 = vector.shape_cast %249 : vector<8x1xi1> to vector<8x1xi1>
    %256 = vector.broadcast %255 : vector<8x1xi1> to vector<8x32xi1>
    %257 = arith.select %256, %227, %199 : vector<8x32xi1>, vector<8x32xf32>
    %258 = vector.shape_cast %251 : vector<8x1xi1> to vector<8x1xi1>
    %259 = vector.broadcast %258 : vector<8x1xi1> to vector<8x32xi1>
    %260 = arith.select %259, %247, %202 : vector<8x32xi1>, vector<8x32xbf16>
    %261 = vector.shape_cast %251 : vector<8x1xi1> to vector<8x1xi1>
    %262 = vector.broadcast %261 : vector<8x1xi1> to vector<8x32xi1>
    %263 = arith.select %262, %244, %205 : vector<8x32xi1>, vector<8x32xf32>
    %c0_48 = arith.constant 0 : index
    %c0_49 = arith.constant 0 : index
    %264 = vector.load %arg11[%c0_48, %c0_49] : memref<8x32xbf16, #tpu.memory_space<vmem>>, vector<8x32xbf16>
    tpu.vector_store %arg11[%c0_48, %c0_49], %254 {strides = array<i32>} : memref<8x32xbf16, #tpu.memory_space<vmem>>, vector<8x32xbf16>,
    %c0_50 = arith.constant 0 : index
    %c0_51 = arith.constant 0 : index
    %265 = vector.load %arg12[%c0_50, %c0_51] : memref<8x32xbf16, #tpu.memory_space<vmem>>, vector<8x32xbf16>
    tpu.vector_store %arg12[%c0_50, %c0_51], %260 {strides = array<i32>} : memref<8x32xbf16, #tpu.memory_space<vmem>>, vector<8x32xbf16>,
    %c0_52 = arith.constant 0 : index
    %c0_53 = arith.constant 0 : index
    %266 = vector.load %arg13[%c0_52, %c0_53] : memref<8x32xf32, #tpu.memory_space<vmem>>, vector<8x32xf32>
    tpu.vector_store %arg13[%c0_52, %c0_53], %257 {strides = array<i32>} : memref<8x32xf32, #tpu.memory_space<vmem>>, vector<8x32xf32>,
    %c0_54 = arith.constant 0 : index
    %c0_55 = arith.constant 0 : index
    %267 = vector.load %arg14[%c0_54, %c0_55] : memref<8x32xf32, #tpu.memory_space<vmem>>, vector<8x32xf32>
    tpu.vector_store %arg14[%c0_54, %c0_55], %263 {strides = array<i32>} : memref<8x32xf32, #tpu.memory_space<vmem>>, vector<8x32xf32>,
    %c1_i32 = arith.constant 1 : i32
    %268 = arith.cmpi eq, %arg1, %c1_i32 : i32
    %269 = arith.extui %268 : i1 to i32
    %c0_i32_56 = arith.constant 0 : i32
    %270 = arith.cmpi ne, %269, %c0_i32_56 : i32
    scf.if %270 {
      %271 = tpu.concatenate %254, %260 in 1 : vector<8x32xbf16>, vector<8x32xbf16> -> vector<8x64xbf16>
      %272 = arith.extf %271 : vector<8x64xbf16> to vector<8x64xf32>
      %c0_57 = arith.constant 0 : index
      %c0_58 = arith.constant 0 : index
      %273 = vector.load %arg8[%c0_57, %c0_58] : memref<1x64xf32, #tpu.memory_space<vmem>>, vector<1x64xf32>
      %274 = vector.broadcast %273 : vector<1x64xf32> to vector<8x64xf32>
      %275 = arith.mulf %272, %274 : vector<8x64xf32>
      %cst_59 = arith.constant dense<0.000000e+00> : vector<8xf32>
      %276 = vector.multi_reduction <add>, %275, %cst_59 [1] : vector<8x64xf32> to vector<8xf32>
      %277 = vector.shape_cast %276 : vector<8xf32> to vector<8x1xf32>
      %c0_60 = arith.constant 0 : index
      %c0_61 = arith.constant 0 : index
      %278 = vector.load %arg9[%c0_60, %c0_61] : memref<1x1xf32, #tpu.memory_space<vmem>>, vector<1x1xf32>
      %279 = vector.broadcast %278 : vector<1x1xf32> to vector<8x1xf32>
      %280 = arith.addf %277, %279 : vector<8x1xf32>
      %281 = arith.negf %280 : vector<8x1xf32>
      %282 = math.exp %281 : vector<8x1xf32>
      %cst_62 = arith.constant 1.000000e+00 : f32
      %283 = vector.broadcast %cst_62 : f32 to vector<8x1xf32>
      %284 = arith.addf %283, %282 : vector<8x1xf32>
      %285 = arith.divf %283, %284 : vector<8x1xf32>
      %c0_63 = arith.constant 0 : index
      %c0_64 = arith.constant 0 : index
      %286 = vector.load %arg10[%c0_63, %c0_64] : memref<8x1xf32, #tpu.memory_space<vmem>>, vector<8x1xf32>
      tpu.vector_store %arg10[%c0_63, %c0_64], %285 {strides = array<i32>} : memref<8x1xf32, #tpu.memory_space<vmem>>, vector<8x1xf32>,
    } else {
    }
    return
  }
  func.func @transform_0(%arg0: i32, %arg1: i32) -> (i32, i32) {
    %c0_i32 = arith.constant 0 : i32
    %c0_i32_0 = arith.constant 0 : i32
    return %arg0, %c0_i32 : i32, i32
  }
  func.func @transform_1(%arg0: i32, %arg1: i32) -> (i32, i32, i32) {
    %c0_i32 = arith.constant 0 : i32
    %c0_i32_0 = arith.constant 0 : i32
    return %arg0, %arg1, %c0_i32 : i32, i32, i32
  }
  func.func @transform_2(%arg0: i32, %arg1: i32) -> (i32, i32, i32) {
    %c1_i32 = arith.constant 1 : i32
    %0 = arith.subi %c1_i32, %arg1 : i32
    %c0_i32 = arith.constant 0 : i32
    %c0_i32_0 = arith.constant 0 : i32
    return %arg0, %0, %c0_i32 : i32, i32, i32
  }
  func.func @transform_3(%arg0: i32, %arg1: i32) -> (i32, i32) {
    %c0_i32 = arith.constant 0 : i32
    %c0_i32_0 = arith.constant 0 : i32
    %c0_i32_1 = arith.constant 0 : i32
    return %c0_i32, %c0_i32_0 : i32, i32
  }
  func.func @transform_4(%arg0: i32, %arg1: i32) -> (i32, i32) {
    %c0_i32 = arith.constant 0 : i32
    %c0_i32_0 = arith.constant 0 : i32
    %c0_i32_1 = arith.constant 0 : i32
    return %c0_i32, %c0_i32_0 : i32, i32
  }
  func.func @transform_5(%arg0: i32, %arg1: i32) -> (i32, i32) {
    %c0_i32 = arith.constant 0 : i32
    %c0_i32_0 = arith.constant 0 : i32
    %c0_i32_1 = arith.constant 0 : i32
    return %c0_i32, %c0_i32_0 : i32, i32
  }
  func.func @transform_6(%arg0: i32, %arg1: i32) -> (i32, i32) {
    %c0_i32 = arith.constant 0 : i32
    %c0_i32_0 = arith.constant 0 : i32
    %c0_i32_1 = arith.constant 0 : i32
    return %c0_i32, %c0_i32_0 : i32, i32
  }
  func.func @transform_7(%arg0: i32, %arg1: i32) -> (i32, i32) {
    %c0_i32 = arith.constant 0 : i32
    %c0_i32_0 = arith.constant 0 : i32
    %c0_i32_1 = arith.constant 0 : i32
    return %c0_i32, %c0_i32_0 : i32, i32
  }
  func.func @transform_8(%arg0: i32, %arg1: i32) -> (i32, i32) {
    %c0_i32 = arith.constant 0 : i32
    %c0_i32_0 = arith.constant 0 : i32
    return %arg0, %c0_i32 : i32, i32
  }
}

</mosaic_0001>

<llo_original>
// kernel: bilstm_forward.1
$region0: #{bilstm_forward.1}
  #allocation0 [shape = 'u32[]', space=smem, size = 0x4, offset = 0x4, fixed_abs, tag = 'smem constant byte address 0x4 - core index']
  #allocation1 [shape = 'u32[144,128]{1,0:T(1,128)}', space=vmem, size = 0x12000, scoped, tag = 'internal scratch']
  #allocation2 [shape = 'bf16[8,32]{1,0:T(8,128)(2,1)}', space=vmem, size = 0x800, scoped, tag = 'scratch operand']
  #allocation3 [shape = 'bf16[8,32]{1,0:T(8,128)(2,1)}', space=vmem, size = 0x800, scoped, tag = 'scratch operand']
  #allocation4 [shape = 'f32[8,32]{1,0:T(8,128)}', space=vmem, size = 0x1000, scoped, tag = 'scratch operand']
  #allocation5 [shape = 'f32[8,32]{1,0:T(8,128)}', space=vmem, size = 0x1000, scoped, tag = 'scratch operand']
  #allocation6 [shape = 'f32[32,256]{1,0:T(8,128)}', space=vmem, size = 0x8000, scoped, tag = 'scratch operand']
  #allocation7 [shape = 'f32[1,1]{1,0:T(1,128)S(1)}', space=vmem, size = 0x200, scoped, tag = 'scoped memory for bilstm_forward.1']
  %s0 = inlined_call_operand.vmem [shape: s32[8,1], index: 0, kind: input, shape index: {}]
  %s1 = inlined_call_operand.vmem [shape: bf16[1,64,16], index: 1, kind: input, shape index: {}, may-alias: {1,2}]
  %s2 = inlined_call_operand.vmem [shape: bf16[1,64,16], index: 2, kind: input, shape index: {}, may-alias: {1,2}]
  %s3 = inlined_call_operand.vmem [shape: bf16[32,256], index: 3, kind: input, shape index: {}]
  %s4 = inlined_call_operand.vmem [shape: bf16[64,256], index: 4, kind: input, shape index: {}]
  %s5 = inlined_call_operand.vmem [shape: f32[1,256], index: 5, kind: input, shape index: {}]
  %s6 = inlined_call_operand.vmem [shape: f32[1,64], index: 6, kind: input, shape index: {}]
  %s7 = inlined_call_operand.<no memory space> [shape: f32[1,1], index: 7, kind: input, shape index: {}]
  %s8 = inlined_call_operand.vmem [shape: f32[8,1], index: 8, kind: output, shape index: {}]
  %s9 = sld [smem:[#allocation0]]
  $region73: #{bilstm_forward.1} parent=0
    _
  %s11 = ssub.s32 1, %s9
  %s12 = scalar_select 0, %s11, %s9
  %v13 = vstv %s7
  %14 = vst [vmem:[#allocation7] sm:$0x1] %v13
  loop: start=0, step=1, limit=4
  $region2: #{bilstm_forward.1} parent=0 // loop_pre_header
    _
  $region3: #{bilstm_forward.1} parent=0 // loop_header
    %s16 = sphi 0, %s20
    %p17 = scmp.ge.s32.totalorder %s16, 4
    %s23 = sphi 0, %s35
    %s24 = sphi 0, %s31
    %s25 = sphi 0, %s23
    %s26 = sphi 0, %s24
    %s27 = sphi 0, %s25
    %s28 = sphi 0, %s26
    %s38 = sphi 0, %s40
    %s41 = sphi 0, %s38
    %s42 = sphi 0, %s41
    %s58 = sphi 0, %s42
    %s66 = sphi 0, %s68
    %s69 = sphi 0, %s66
    %s70 = sphi 0, %s69
    %s86 = sphi 0, %s70
    %s96 = sphi 0, %s98
    %s99 = sphi 0, %s96
    %s100 = sphi 0, %s99
    %s116 = sphi 0, %s100
    %s120 = sphi 0, %s120
    %s122 = sphi 0, %s120
    %s123 = sphi 0, %s122
    %s137 = sphi 0, %s123
    %s141 = sphi 0, %s141
    %s143 = sphi 0, %s141
    %s144 = sphi 0, %s143
    %s158 = sphi 0, %s144
    %s162 = sphi 0, %s162
    %s164 = sphi 0, %s162
    %s165 = sphi 0, %s164
    %s179 = sphi 0, %s165
    %s183 = sphi 0, %s183
    %s185 = sphi 0, %s183
    %s186 = sphi 0, %s185
    %s200 = sphi 0, %s186
    %s204 = sphi 0, %s204
    %s206 = sphi 0, %s204
    %s207 = sphi 0, %s206
    %s221 = sphi 0, %s207
    %s227 = sphi 0, %s229
    %s230 = sphi 0, %s227
    %s231 = sphi 0, %s230
    %s247 = sphi 0, %s231
  $region4: #{bilstm_forward.1} parent=0 // loop_header_branch
    %19 = sbr.rel (%p17) target = $region8
  $region5: #{bilstm_forward.1} parent=0 // loop_body
    %s21 = ssub.s32 %s16, 1
    %s22 = ssub.s32 %s16, 2
    %s29 = sadd.s32 1, %s24
    %p30 = scmp.ge.s32.totalorder %s29, 2
    %s31 = scalar_select %p30, 0, %s29
    %s32 = sadd.s32 1, %s23
    %s33 = scalar_select %p30, %s32, %s23
    %p34 = scmp.ge.s32.totalorder %s33, 1
    %s35 = scalar_select %p34, 0, %s33
    %s36 = ssub.s32 %s23, %s35
    %p37 = scmp.eq.s32.totalorder %s36, 0
    %s39 = sadd.s32 %s38, 1
    %s40 = scalar_select %p37, %s38, %s39
    %p43 = pneg %p37
    %p44 = scmp.eq.s32.totalorder %s16, 1
    %p45 = por %p43, %p44
    %p46 = scmp.ne.s32.totalorder %s38, %s41
    %p47 = scmp.eq.s32.totalorder %s16, 0
    %p48 = por %p46, %p47
    %p49 = scmp.ne.s32.totalorder %s38, %s41
    %p50 = scmp.eq.s32.totalorder %s21, 1
    %p51 = por %p49, %p50
    %p52 = scmp.ne.s32.totalorder %s41, %s42
    %p53 = scmp.eq.s32.totalorder %s21, 0
    %p54 = por %p52, %p53
    %p55 = scmp.ne.s32.totalorder %s41, %s42
    %p56 = scmp.eq.s32.totalorder %s22, 1
    %p57 = por %p55, %p56
    %p59 = scmp.ne.s32.totalorder %s42, %s58
    %p60 = scmp.eq.s32.totalorder %s22, 0
    %p61 = por %p59, %p60
    %s62 = ssub.s32 %s23, %s35
    %s63 = ssub.s32 %s24, %s31
    %s64 = sor.u32 %s62, %s63
    %p65 = scmp.eq.s32.totalorder %s64, 0
    %s67 = sadd.s32 %s66, 1
    %s68 = scalar_select %p65, %s66, %s67
    %p71 = pneg %p65
    %p72 = scmp.eq.s32.totalorder %s16, 1
    %p73 = por %p71, %p72
    %p74 = scmp.ne.s32.totalorder %s66, %s69
    %p75 = scmp.eq.s32.totalorder %s16, 0
    %p76 = por %p74, %p75
    %p77 = scmp.ne.s32.totalorder %s66, %s69
    %p78 = scmp.eq.s32.totalorder %s21, 1
    %p79 = por %p77, %p78
    %p80 = scmp.ne.s32.totalorder %s69, %s70
    %p81 = scmp.eq.s32.totalorder %s21, 0
    %p82 = por %p80, %p81
    %p83 = scmp.ne.s32.totalorder %s69, %s70
    %p84 = scmp.eq.s32.totalorder %s22, 1
    %p85 = por %p83, %p84
    %p87 = scmp.ne.s32.totalorder %s70, %s86
    %p88 = scmp.eq.s32.totalorder %s22, 0
    %p89 = por %p87, %p88
    %s90 = ssub.s32 1, %s24
    %s91 = ssub.s32 1, %s31
    %s92 = ssub.s32 %s23, %s35
    %s93 = ssub.s32 %s90, %s91
    %s94 = sor.u32 %s92, %s93
    %p95 = scmp.eq.s32.totalorder %s94, 0
    %s97 = sadd.s32 %s96, 1
    %s98 = scalar_select %p95, %s96, %s97
    %p101 = pneg %p95
    %p102 = scmp.eq.s32.totalorder %s16, 1
    %p103 = por %p101, %p102
    %p104 = scmp.ne.s32.totalorder %s96, %s99
    %p105 = scmp.eq.s32.totalorder %s16, 0
    %p106 = por %p104, %p105
    %p107 = scmp.ne.s32.totalorder %s96, %s99
    %p108 = scmp.eq.s32.totalorder %s21, 1
    %p109 = por %p107, %p108
    %p110 = scmp.ne.s32.totalorder %s99, %s100
    %p111 = scmp.eq.s32.totalorder %s21, 0
    %p112 = por %p110, %p111
    %p113 = scmp.ne.s32.totalorder %s99, %s100
    %p114 = scmp.eq.s32.totalorder %s22, 1
    %p115 = por %p113, %p114
    %p117 = scmp.ne.s32.totalorder %s100, %s116
    %p118 = scmp.eq.s32.totalorder %s22, 0
    %p119 = por %p117, %p118
    %s121 = sadd.s32 %s120, 1
    %p124 = scmp.eq.s32.totalorder %s16, 1
    %p125 = scmp.ne.s32.totalorder %s120, %s122
    %p126 = scmp.eq.s32.totalorder %s16, 0
    %p127 = por %p125, %p126
    %p128 = scmp.ne.s32.totalorder %s120, %s122
    %p129 = scmp.eq.s32.totalorder %s21, 1
    %p130 = por %p128, %p129
    %p131 = scmp.ne.s32.totalorder %s122, %s123
    %p132 = scmp.eq.s32.totalorder %s21, 0
    %p133 = por %p131, %p132
    %p134 = scmp.ne.s32.totalorder %s122, %s123
    %p135 = scmp.eq.s32.totalorder %s22, 1
    %p136 = por %p134, %p135
    %p138 = scmp.ne.s32.totalorder %s123, %s137
    %p139 = scmp.eq.s32.totalorder %s22, 0
    %p140 = por %p138, %p139
    %s142 = sadd.s32 %s141, 1
    %p145 = scmp.eq.s32.totalorder %s16, 1
    %p146 = scmp.ne.s32.totalorder %s141, %s143
    %p147 = scmp.eq.s32.totalorder %s16, 0
    %p148 = por %p146, %p147
    %p149 = scmp.ne.s32.totalorder %s141, %s143
    %p150 = scmp.eq.s32.totalorder %s21, 1
    %p151 = por %p149, %p150
    %p152 = scmp.ne.s32.totalorder %s143, %s144
    %p153 = scmp.eq.s32.totalorder %s21, 0
    %p154 = por %p152, %p153
    %p155 = scmp.ne.s32.totalorder %s143, %s144
    %p156 = scmp.eq.s32.totalorder %s22, 1
    %p157 = por %p155, %p156
    %p159 = scmp.ne.s32.totalorder %s144, %s158
    %p160 = scmp.eq.s32.totalorder %s22, 0
    %p161 = por %p159, %p160
    %s163 = sadd.s32 %s162, 1
    %p166 = scmp.eq.s32.totalorder %s16, 1
    %p167 = scmp.ne.s32.totalorder %s162, %s164
    %p168 = scmp.eq.s32.totalorder %s16, 0
    %p169 = por %p167, %p168
    %p170 = scmp.ne.s32.totalorder %s162, %s164
    %p171 = scmp.eq.s32.totalorder %s21, 1
    %p172 = por %p170, %p171
    %p173 = scmp.ne.s32.totalorder %s164, %s165
    %p174 = scmp.eq.s32.totalorder %s21, 0
    %p175 = por %p173, %p174
    %p176 = scmp.ne.s32.totalorder %s164, %s165
    %p177 = scmp.eq.s32.totalorder %s22, 1
    %p178 = por %p176, %p177
    %p180 = scmp.ne.s32.totalorder %s165, %s179
    %p181 = scmp.eq.s32.totalorder %s22, 0
    %p182 = por %p180, %p181
    %s184 = sadd.s32 %s183, 1
    %p187 = scmp.eq.s32.totalorder %s16, 1
    %p188 = scmp.ne.s32.totalorder %s183, %s185
    %p189 = scmp.eq.s32.totalorder %s16, 0
    %p190 = por %p188, %p189
    %p191 = scmp.ne.s32.totalorder %s183, %s185
    %p192 = scmp.eq.s32.totalorder %s21, 1
    %p193 = por %p191, %p192
    %p194 = scmp.ne.s32.totalorder %s185, %s186
    %p195 = scmp.eq.s32.totalorder %s21, 0
    %p196 = por %p194, %p195
    %p197 = scmp.ne.s32.totalorder %s185, %s186
    %p198 = scmp.eq.s32.totalorder %s22, 1
    %p199 = por %p197, %p198
    %p201 = scmp.ne.s32.totalorder %s186, %s200
    %p202 = scmp.eq.s32.totalorder %s22, 0
    %p203 = por %p201, %p202
    %s205 = sadd.s32 %s204, 1
    %p208 = scmp.eq.s32.totalorder %s16, 1
    %p209 = scmp.ne.s32.totalorder %s204, %s206
    %p210 = scmp.eq.s32.totalorder %s16, 0
    %p211 = por %p209, %p210
    %p212 = scmp.ne.s32.totalorder %s204, %s206
    %p213 = scmp.eq.s32.totalorder %s21, 1
    %p214 = por %p212, %p213
    %p215 = scmp.ne.s32.totalorder %s206, %s207
    %p216 = scmp.eq.s32.totalorder %s21, 0
    %p217 = por %p215, %p216
    %p218 = scmp.ne.s32.totalorder %s206, %s207
    %p219 = scmp.eq.s32.totalorder %s22, 1
    %p220 = por %p218, %p219
    %p222 = scmp.ne.s32.totalorder %s207, %s221
    %p223 = scmp.eq.s32.totalorder %s22, 0
    %p224 = por %p222, %p223
    %s225 = ssub.s32 %s23, %s35
    %p226 = scmp.eq.s32.totalorder %s225, 0
    %s228 = sadd.s32 %s227, 1
    %s229 = scalar_select %p226, %s227, %s228
    %p232 = pneg %p226
    %p233 = scmp.eq.s32.totalorder %s16, 1
    %p234 = por %p232, %p233
    %p235 = scmp.ne.s32.totalorder %s227, %s230
    %p236 = scmp.eq.s32.totalorder %s16, 0
    %p237 = por %p235, %p236
    %p238 = scmp.ne.s32.totalorder %s227, %s230
    %p239 = scmp.eq.s32.totalorder %s21, 1
    %p240 = por %p238, %p239
    %p241 = scmp.ne.s32.totalorder %s230, %s231
    %p242 = scmp.eq.s32.totalorder %s21, 0
    %p243 = por %p241, %p242
    %p244 = scmp.ne.s32.totalorder %s230, %s231
    %p245 = scmp.eq.s32.totalorder %s22, 1
    %p246 = por %p244, %p245
    %p248 = scmp.ne.s32.totalorder %s231, %s247
    %p249 = scmp.eq.s32.totalorder %s22, 0
    %p250 = por %p248, %p249
    %p251 = scmp.le.s32.totalorder 1, %s16
    %p252 = scmp.lt.s32.totalorder %s16, 3
    %p253 = pnand %p251, %p252
    %p254 = pneg %p253
    // Predicated region
    $region9: #{bilstm_forward.1} parent=5 // pred_check
      _
    $region10: #{bilstm_forward.1} parent=5 // pred_check_branch
      %256 = sbr.rel (%p253) target = $region12
    $region11: #{bilstm_forward.1} parent=5 // pred_region
      %s257 = ssub.s32 %s16, 1
      // Predicated region
      $region13: #{bilstm_forward.1} parent=11 // pred_check
        %p258 = pneg %p54
      $region14: #{bilstm_forward.1} parent=11 // pred_check_branch
        %260 = sbr.rel (%p258) target = $region16
      $region15: #{bilstm_forward.1} parent=11 // pred_region
        %p261 = scmp.lt.s32.totalorder %s25, 0
        %s262 = scalar_select %p261, %s25, 0
        %s263 = smul.addr %s262, 8
        %s264 = scalar_lea.vmem %s0, %s263
      $region16: #{bilstm_forward.1} parent=11 // pred_fallthru
        _
      // Predicated region
      $region17: #{bilstm_forward.1} parent=11 // pred_check
        %p265 = pneg %p133
      $region18: #{bilstm_forward.1} parent=11 // pred_check_branch
        %267 = sbr.rel (%p265) target = $region20
      $region19: #{bilstm_forward.1} parent=11 // pred_region
        _
      $region20: #{bilstm_forward.1} parent=11 // pred_fallthru
        _
      // Predicated region
      $region21: #{bilstm_forward.1} parent=11 // pred_check
        %p268 = pneg %p154
      $region22: #{bilstm_forward.1} parent=11 // pred_check_branch
        %270 = sbr.rel (%p268) target = $region24
      $region23: #{bilstm_forward.1} parent=11 // pred_region
        _
      $region24: #{bilstm_forward.1} parent=11 // pred_fallthru
        _
      // Predicated region
      $region25: #{bilstm_forward.1} parent=11 // pred_check
        %p271 = pneg %p175
      $region26: #{bilstm_forward.1} parent=11 // pred_check_branch
        %273 = sbr.rel (%p271) target = $region28
      $region27: #{bilstm_forward.1} parent=11 // pred_region
        _
      $region28: #{bilstm_forward.1} parent=11 // pred_fallthru
        _
      // Predicated region
      $region29: #{bilstm_forward.1} parent=11 // pred_check
        %p274 = pneg %p196
      $region30: #{bilstm_forward.1} parent=11 // pred_check_branch
        %276 = sbr.rel (%p274) target = $region32
      $region31: #{bilstm_forward.1} parent=11 // pred_region
        _
      $region32: #{bilstm_forward.1} parent=11 // pred_fallthru
        _
      // Predicated region
      $region33: #{bilstm_forward.1} parent=11 // pred_check
        %p277 = pneg %p217
      $region34: #{bilstm_forward.1} parent=11 // pred_check_branch
        %279 = sbr.rel (%p277) target = $region36
      $region35: #{bilstm_forward.1} parent=11 // pred_region
        _
      $region36: #{bilstm_forward.1} parent=11 // pred_fallthru
        _
    $region12: #{bilstm_forward.1} parent=5 // pred_fallthru
      _
    %p280 = scmp.lt.s32.totalorder %s16, 2
    // Predicated region
    $region37: #{bilstm_forward.1} parent=5 // pred_check
      %p281 = pneg %p280
    $region38: #{bilstm_forward.1} parent=5 // pred_check_branch
      %283 = sbr.rel (%p281) target = $region40
    $region39: #{bilstm_forward.1} parent=5 // pred_region
      // Predicated region
      $region41: #{bilstm_forward.1} parent=39 // pred_check
        %p284 = pneg %p76
      $region42: #{bilstm_forward.1} parent=39 // pred_check_branch
        %286 = sbr.rel (%p284) target = $region44
      $region43: #{bilstm_forward.1} parent=39 // pred_region
        %s287 = smul.u32 4, %s24
        %p288 = scmp.lt.s32.totalorder %s23, 0
        %s289 = scalar_select %p288, %s23, 0
        %p290 = scmp.lt.s32.totalorder %s287, 7
        %s291 = scalar_select %p290, %s287, 7
        %s292 = smul.addr %s289, 8
        %s293 = sadd.s32 %s291, %s292
        %s294 = smul.addr %s293, 4
        %s295 = scalar_lea.vmem %s1, %s294
        %s296 = smul.u32 4, %s24
      $region44: #{bilstm_forward.1} parent=39 // pred_fallthru
        _
      // Predicated region
      $region45: #{bilstm_forward.1} parent=39 // pred_check
        %p297 = pneg %p106
      $region46: #{bilstm_forward.1} parent=39 // pred_check_branch
        %299 = sbr.rel (%p297) target = $region48
      $region47: #{bilstm_forward.1} parent=39 // pred_region
        %s300 = ssub.s32 1, %s24
        %s301 = smul.u32 4, %s300
        %p302 = scmp.lt.s32.totalorder %s23, 0
        %s303 = scalar_select %p302, %s23, 0
        %p304 = scmp.lt.s32.totalorder %s301, 7
        %s305 = scalar_select %p304, %s301, 7
        %s306 = smul.addr %s303, 8
        %s307 = sadd.s32 %s305, %s306
        %s308 = smul.addr %s307, 4
        %s309 = scalar_lea.vmem %s2, %s308
        %s310 = ssub.s32 1, %s24
        %s311 = smul.u32 4, %s310
      $region48: #{bilstm_forward.1} parent=39 // pred_fallthru
        _
    $region40: #{bilstm_forward.1} parent=5 // pred_fallthru
      _
    %p312 = scmp.le.s32.totalorder 1, %s16
    %p313 = scmp.lt.s32.totalorder %s16, 3
    %p314 = pnand %p312, %p313
    %p315 = pneg %p314
    // Predicated region
    $region49: #{bilstm_forward.1} parent=5 // pred_check
      _
    $region50: #{bilstm_forward.1} parent=5 // pred_check_branch
      %317 = sbr.rel (%p314) target = $region52
    $region51: #{bilstm_forward.1} parent=5 // pred_region
      %s318 = ssub.s32 %s16, 1
      %p319 = scmp.lt.s32.totalorder %s25, 0
      %s320 = scalar_select %p319, %s25, 0
      %s321 = smul.addr %s320, 8
      %s322 = scalar_lea.vmem %s0, %s321
      %p323 = pneg %p54
      %p324 = pneg %p51
      %s325 = smul.u32 4, %s26
      %p326 = scmp.lt.s32.totalorder %s25, 0
      %s327 = scalar_select %p326, %s25, 0
      %p328 = scmp.lt.s32.totalorder %s325, 7
      %s329 = scalar_select %p328, %s325, 7
      %s330 = smul.addr %s327, 8
      %s331 = sadd.s32 %s329, %s330
      %s332 = smul.addr %s331, 4
      %s333 = scalar_lea.vmem %s1, %s332
      %p334 = pneg %p82
      %p335 = pneg %p79
      %s336 = ssub.s32 1, %s26
      %s337 = smul.u32 4, %s336
      %p338 = scmp.lt.s32.totalorder %s25, 0
      %s339 = scalar_select %p338, %s25, 0
      %p340 = scmp.lt.s32.totalorder %s337, 7
      %s341 = scalar_select %p340, %s337, 7
      %s342 = smul.addr %s339, 8
      %s343 = sadd.s32 %s341, %s342
      %s344 = smul.addr %s343, 4
      %s345 = scalar_lea.vmem %s2, %s344
      %p346 = pneg %p112
      %p347 = pneg %p109
      %p348 = pneg %p133
      %p349 = pneg %p130
      %p350 = pneg %p154
      %p351 = pneg %p151
      %p352 = pneg %p175
      %p353 = pneg %p172
      %p354 = pneg %p196
      %p355 = pneg %p193
      %p356 = pneg %p217
      %p357 = pneg %p214
      %p358 = pneg %p243
      %p359 = pneg %p240
      %p360 = scmp.lt.s32.totalorder %s25, 0
      %s361 = scalar_select %p360, %s25, 0
      %s362 = smul.addr %s361, 8
      %s363 = scalar_lea.vmem %s8, %s362
      %p364 = scmp.lt.s32.totalorder %s25, 0
      %s365 = scalar_select %p364, %s25, 0
      %s366 = smul.addr %s365, 8
      %s367 = scalar_lea.vmem %s0, %s366
      %s368 = smul.u32 4, %s26
      %p369 = scmp.lt.s32.totalorder %s25, 0
      %s370 = scalar_select %p369, %s25, 0
      %p371 = scmp.lt.s32.totalorder %s368, 7
      %s372 = scalar_select %p371, %s368, 7
      %s373 = smul.addr %s370, 8
      %s374 = sadd.s32 %s372, %s373
      %s375 = smul.addr %s374, 4
      %s376 = scalar_lea.vmem %s1, %s375
      %s377 = smul.u32 4, %s26
      %s378 = ssub.s32 1, %s26
      %s379 = smul.u32 4, %s378
      %p380 = scmp.lt.s32.totalorder %s25, 0
      %s381 = scalar_select %p380, %s25, 0
      %p382 = scmp.lt.s32.totalorder %s379, 7
      %s383 = scalar_select %p382, %s379, 7
      %s384 = smul.addr %s381, 8
      %s385 = sadd.s32 %s383, %s384
      %s386 = smul.addr %s385, 4
      %s387 = scalar_lea.vmem %s2, %s386
      %s388 = ssub.s32 1, %s26
      %s389 = smul.u32 4, %s388
      %p390 = scmp.lt.s32.totalorder %s25, 0
      %s391 = scalar_select %p390, %s25, 0
      %s392 = smul.addr %s391, 8
      %s393 = scalar_lea.vmem %s8, %s392
      %p395 = scmp.eq.s32.totalorder %s26, 0
      // Predicated region
      $region53: #{bilstm_forward.1} parent=51 // pred_check
        %p396 = pneg %p395
      $region54: #{bilstm_forward.1} parent=51 // pred_check_branch
        %398 = sbr.rel (%p396) target = $region56
      $region55: #{bilstm_forward.1} parent=51 // pred_region
        %vm399 = vcmask 257024
        %400 = vst.msk [vmem:[#allocation2] sm:$0xf] %vm399, 0
        %401 = vst.msk [vmem:[#allocation3] sm:$0xf] %vm399, 0
        %vm402 = vcmask 261120
        %403 = vst.msk [vmem:[#allocation4] sm:$0xff] %vm402, 0.0
        %404 = vst.msk [vmem:[#allocation5] sm:$0xff] %vm402, 0.0
      $region56: #{bilstm_forward.1} parent=51 // pred_fallthru
        _
      %v405 = vld [vmem:[%s367] sm:$0xff]
      %s406 = smul.u32 %s26, 4
      %v407 = vstv %s406
      %v408 = vadd.s32 %v407, 1
      %v409 = vadd.s32 %v407, 2
      %v410 = vadd.s32 %v407, 3
      %vm411 = vcmp.lt.s32.totalorder %v407, %v405
      %vm412 = vcmp.lt.s32.totalorder %v408, %v405
      %vm413 = vcmp.lt.s32.totalorder %v409, %v405
      %vm414 = vcmp.lt.s32.totalorder %v410, %v405
      %v415 = vsub.s32 7, %v407
      %v416 = vsub.s32 7, %v408
      %v417 = vsub.s32 7, %v409
      %v418 = vsub.s32 7, %v410
      %vm419 = vcmp.lt.s32.totalorder %v415, %v405
      %vm420 = vcmp.lt.s32.totalorder %v416, %v405
      %vm421 = vcmp.lt.s32.totalorder %v417, %v405
      %vm422 = vcmp.lt.s32.totalorder %v418, %v405
      %v423 = vld [vmem:[%s376] sm:$0xf]
      %v424 = vld [vmem:[%s376 + $0x4] sm:$0xf]
      %v425 = vld [vmem:[%s376 + $0x8] sm:$0xf]
      %v426 = vld [vmem:[%s376 + $0xc] sm:$0xf]
      %v427 = vld [vmem:[%s387] sm:$0xf]
      %v428 = vld [vmem:[%s387 + $0x4] sm:$0xf]
      %v429 = vld [vmem:[%s387 + $0x8] sm:$0xf]
      %v430 = vld [vmem:[%s387 + $0xc] sm:$0xf]
      %v435 = vunpack.c.l.b16 %v423
      %v436 = vunpack.c.l.b16 %v424
      %v437 = vunpack.c.l.b16 %v425
      %v438 = vunpack.c.l.b16 %v426
      %v439 = vpack.c.b16 %v436, %v435
      %v440 = vpack.c.b16 %v438, %v437
      %v445 = vunpack.c.l.b16 %v427
      %v446 = vunpack.c.l.b16 %v428
      %v447 = vunpack.c.l.b16 %v429
      %v448 = vunpack.c.l.b16 %v430
      %v449 = vpack.c.b16 %v446, %v445
      %v450 = vpack.c.b16 %v448, %v447
      %451 = vrot.lane.b32.xlu0 %v449, 16
      %v452 = vpop.permute.xlu0 %451
      %453 = vrot.lane.b32.xlu0 %v450, 16
      %v454 = vpop.permute.xlu0 %453
      %vm455 = vcmask 130048
      %v458 = vsel %vm455, %v439, %v452
      %v461 = vsel %vm455, %v440, %v454
      %v462 = vld [vmem:[%s3] sm:$0xff]
      %v463 = vld [vmem:[%s3 + $0x8] sm:$0xff]
      %v464 = vld [vmem:[%s3 + $0x10] sm:$0xff]
      %v465 = vld [vmem:[%s3 + $0x18] sm:$0xff]
      %v466 = vld [vmem:[%s5] sm:$0x3]
      %v468 = vlaneseq
      %v469 = vshrl.u32 %v468, 7
      %v470 = vsub.s32 0, %v469
      %v471 = vrot.slane %v466, %v470
      %v472 = vlaneseq
      %v473 = vshrl.u32 %v472, 7
      %v474 = vsub.s32 1, %v473
      %v475 = vrot.slane %v466, %v474
      %v482 = vunpack.c.l.b16 %v462
      %v483 = vunpack.c.h.b16 %v462
      %v484 = vunpack.c.l.b16 %v463
      %v485 = vunpack.c.h.b16 %v463
      %v486 = vunpack.c.l.b16 %v464
      %v487 = vunpack.c.h.b16 %v464
      %v488 = vunpack.c.l.b16 %v465
      %v489 = vunpack.c.h.b16 %v465
      %v490 = vpack.c.b16 %v484, %v482
      %v491 = vpack.c.b16 %v485, %v483
      %v492 = vpack.c.b16 %v488, %v486
      %v493 = vpack.c.b16 %v489, %v487
      %vm498 = vcmask 261120
      %v499 = vsel %vm498, %v458, 0
      %v501 = vsel %vm498, %v461, 0
      %503 = vmatprep.subr.bf16.mxu0 %v491
      %504 = vmatpush1.bf16.msra.mxu0 %v490
      %505 = vmatprep.subr.bf16.mxu0 %v493
      %506 = vmatpush1.bf16.msra.mxu0 %v492
      %507 = vmatprep.subr.bf16.mxu0 0
      %508 = vmatpush1.bf16.msra.mxu0 0
      %509 = vmatprep.subr.bf16.mxu0 0
      %510 = vmatpush1.bf16.msra.mxu0 0
      %511 = vmatprep.subr.bf16.mxu0 0
      %512 = vmatpush1.bf16.msra.mxu0 0
      %513 = vmatprep.subr.bf16.mxu0 0
      %514 = vmatpush1.bf16.msra.mxu0 0
      %515 = vmatprep.subr.bf16.mxu0 0
      %516 = vmatpush1.bf16.msra.mxu0 0
      %517 = vmatprep.subr.bf16.mxu0 0
      %518 = vmatpush1.bf16.msra.mxu0 0
      %519 = vmatprep.subr.bf16.mxu0 0
      %520 = vmatpush1.bf16.msra.mxu0 0
      %521 = vmatprep.subr.bf16.mxu0 0
      %522 = vmatpush1.bf16.msra.mxu0 0
      %523 = vmatprep.subr.bf16.mxu0 0
      %524 = vmatpush1.bf16.msra.mxu0 0
      %525 = vmatprep.subr.bf16.mxu0 0
      %526 = vmatpush1.bf16.msra.mxu0 0
      %527 = vmatprep.subr.bf16.mxu0 0
      %528 = vmatpush1.bf16.msra.mxu0 0
      %529 = vmatprep.subr.bf16.mxu0 0
      %530 = vmatpush1.bf16.msra.mxu0 0
      %531 = vmatprep.subr.bf16.mxu0 0
      %532 = vmatpush1.bf16.msra.mxu0 0
      %533 = vmatprep.subr.bf16.mxu0 0
      %534 = vmatpush1.bf16.msra.mxu0 0
      %535 = vmatprep.mubr.bf16.mxu0 0
      %536 = vmatmul.mubr.bf16.gmra.mrb[0].mxu0 %v499
      %v537 = vpop.f32.mrb[0].mxu0
      %v538 = vadd.f32 %v471, %v537
      %v539 = vpop.f32.mrb[0].mxu0
      %v540 = vadd.f32 %v475, %v539
      %v541 = vpop.f32.mrb[0].mxu0
      %v542 = vadd.f32 %v471, %v541
      %v543 = vpop.f32.mrb[0].mxu0
      %v544 = vadd.f32 %v475, %v543
      %545 = vmatprep.mubr.bf16.mxu0 0
      %546 = vmatmul.mubr.bf16.gmra.mrb[0].mxu0 %v501
      %v547 = vpop.f32.mrb[0].mxu0
      %v548 = vadd.f32 %v471, %v547
      %v549 = vpop.f32.mrb[0].mxu0
      %v550 = vadd.f32 %v475, %v549
      %v551 = vpop.f32.mrb[0].mxu0
      %v552 = vadd.f32 %v471, %v551
      %v553 = vpop.f32.mrb[0].mxu0
      %v554 = vadd.f32 %v475, %v553
      %555 = vdwg.mxu0
      %556 = vst [vmem:[#allocation6] sm:$0xff] %v538
      %557 = vst [vmem:[#allocation6 + $0x8] sm:$0xff] %v540
      %558 = vst [vmem:[#allocation6 + $0x10] sm:$0xff] %v542
      %559 = vst [vmem:[#allocation6 + $0x18] sm:$0xff] %v544
      %560 = vst [vmem:[#allocation6 + $0x20] sm:$0xff] %v548
      %561 = vst [vmem:[#allocation6 + $0x28] sm:$0xff] %v550
      %562 = vst [vmem:[#allocation6 + $0x30] sm:$0xff] %v552
      %563 = vst [vmem:[#allocation6 + $0x38] sm:$0xff] %v554
      %v564 = vld [vmem:[%s4] sm:$0xff]
      %v565 = vld [vmem:[%s4 + $0x8] sm:$0xff]
      %v566 = vld [vmem:[%s4 + $0x10] sm:$0xff]
      %v567 = vld [vmem:[%s4 + $0x18] sm:$0xff]
      %v568 = vld [vmem:[%s4 + $0x20] sm:$0xff]
      %v569 = vld [vmem:[%s4 + $0x28] sm:$0xff]
      %v570 = vld [vmem:[%s4 + $0x30] sm:$0xff]
      %v571 = vld [vmem:[%s4 + $0x38] sm:$0xff]
      %v572 = vld [vmem:[#allocation2] sm:$0xf]
      %v573 = vld [vmem:[#allocation3] sm:$0xf]
      %v574 = vld [vmem:[#allocation4] sm:$0xff]
      %v575 = vld [vmem:[#allocation5] sm:$0xff]
      %v577 = vunpack.c.l.b16 %v573
      %v578 = vpack.c.b16 %v577, %v577
      %579 = vrot.lane.b32.xlu0 %v578, 32
      %v580 = vpop.permute.xlu0 %579
      %v583 = vsel %vm498, %v572, %v580
      %v592 = vunpack.c.l.b16 %v564
      %v593 = vunpack.c.h.b16 %v564
      %v594 = vunpack.c.l.b16 %v565
      %v595 = vunpack.c.h.b16 %v565
      %v596 = vunpack.c.l.b16 %v566
      %v597 = vunpack.c.h.b16 %v566
      %v598 = vunpack.c.l.b16 %v567
      %v599 = vunpack.c.h.b16 %v567
      %v600 = vunpack.c.l.b16 %v568
      %v601 = vunpack.c.h.b16 %v568
      %v602 = vunpack.c.l.b16 %v569
      %v603 = vunpack.c.h.b16 %v569
      %v604 = vunpack.c.l.b16 %v570
      %v605 = vunpack.c.h.b16 %v570
      %v606 = vunpack.c.l.b16 %v571
      %v607 = vunpack.c.h.b16 %v571
      %v608 = vpack.c.b16 %v594, %v592
      %v609 = vpack.c.b16 %v595, %v593
      %v610 = vpack.c.b16 %v598, %v596
      %v611 = vpack.c.b16 %v599, %v597
      %v612 = vpack.c.b16 %v602, %v600
      %v613 = vpack.c.b16 %v603, %v601
      %v614 = vpack.c.b16 %v606, %v604
      %v615 = vpack.c.b16 %v607, %v605
      %vm624 = vcmask 523264
      %v625 = vsel %vm624, %v583, 0
      %627 = vmatprep.subr.bf16.mxu0 %v609
      %628 = vmatpush1.bf16.msra.mxu0 %v608
      %629 = vmatprep.subr.bf16.mxu0 %v611
      %630 = vmatpush1.bf16.msra.mxu0 %v610
      %631 = vmatprep.subr.bf16.mxu0 %v613
      %632 = vmatpush1.bf16.msra.mxu0 %v612
      %633 = vmatprep.subr.bf16.mxu0 %v615
      %634 = vmatpush1.bf16.msra.mxu0 %v614
      %635 = vmatprep.subr.bf16.mxu0 0
      %636 = vmatpush1.bf16.msra.mxu0 0
      %637 = vmatprep.subr.bf16.mxu0 0
      %638 = vmatpush1.bf16.msra.mxu0 0
      %639 = vmatprep.subr.bf16.mxu0 0
      %640 = vmatpush1.bf16.msra.mxu0 0
      %641 = vmatprep.subr.bf16.mxu0 0
      %642 = vmatpush1.bf16.msra.mxu0 0
      %643 = vmatprep.subr.bf16.mxu0 0
      %644 = vmatpush1.bf16.msra.mxu0 0
      %645 = vmatprep.subr.bf16.mxu0 0
      %646 = vmatpush1.bf16.msra.mxu0 0
      %647 = vmatprep.subr.bf16.mxu0 0
      %648 = vmatpush1.bf16.msra.mxu0 0
      %649 = vmatprep.subr.bf16.mxu0 0
      %650 = vmatpush1.bf16.msra.mxu0 0
      %651 = vmatprep.subr.bf16.mxu0 0
      %652 = vmatpush1.bf16.msra.mxu0 0
      %653 = vmatprep.subr.bf16.mxu0 0
      %654 = vmatpush1.bf16.msra.mxu0 0
      %655 = vmatprep.subr.bf16.mxu0 0
      %656 = vmatpush1.bf16.msra.mxu0 0
      %657 = vmatprep.subr.bf16.mxu0 0
      %658 = vmatpush1.bf16.msra.mxu0 0
      %659 = vmatprep.mubr.bf16.mxu0 0
      %660 = vmatmul.mubr.bf16.gmra.mrb[0].mxu0 %v625
      %v661 = vpop.f32.mrb[0].mxu0
      %v662 = vadd.f32 0.0, %v661
      %v663 = vpop.f32.mrb[0].mxu0
      %v664 = vadd.f32 0.0, %v663
      %v665 = vpop.f32.mrb[0].mxu0
      %v666 = vpop.f32.mrb[0].mxu0
      %667 = vdwg.mxu0
      %v668 = vld [vmem:[#allocation6] sm:$0xff]
      %v669 = vadd.f32 %v662, %v668
      %v670 = vld [vmem:[#allocation6 + $0x38] sm:$0xff]
      %v671 = vadd.f32 %v664, %v670
      %v672 = vxor.u32 %v669, 2147483648
      %v673 = vmul.f32 %v672, 1.442695
      %v674 = vpow.pop %v673
      %v675 = vadd.f32 %v674, 1.0
      %v676 = vrcp.pop %v675
      %v677 = vmul.f32 1.0, %v676
      %v678 = vtanh.pop %v669
      %680 = vrot.lane.b32.xlu0 %v574, 32
      %v681 = vpop.permute.xlu0 %680
      %v683 = vmul.f32 %v677, %v681
      %685 = vrot.lane.b32.xlu0 %v678, 32
      %v686 = vpop.permute.xlu0 %685
      %v688 = vmul.f32 %v677, %v686
      %690 = vrot.lane.b32.xlu0 %v688, 32
      %v691 = vpop.permute.xlu0 %690
      %v693 = vadd.f32 %v683, %v691
      %v694 = vtanh.pop %v693
      %696 = vrot.lane.b32.xlu0 %v694, 32
      %v697 = vpop.permute.xlu0 %696
      %v699 = vmul.f32 %v677, %v697
      %v700 = vpack.c.bf16 %v699, %v699
      %v701 = vxor.u32 %v671, 2147483648
      %v702 = vmul.f32 %v701, 1.442695
      %v703 = vpow.pop %v702
      %v704 = vadd.f32 %v703, 1.0
      %v705 = vrcp.pop %v704
      %v706 = vmul.f32 1.0, %v705
      %v707 = vtanh.pop %v671
      %709 = vrot.lane.b32.xlu0 %v575, 32
      %v710 = vpop.permute.xlu0 %709
      %v712 = vmul.f32 %v706, %v710
      %714 = vrot.lane.b32.xlu0 %v707, 32
      %v715 = vpop.permute.xlu0 %714
      %v717 = vmul.f32 %v706, %v715
      %719 = vrot.lane.b32.xlu0 %v717, 32
      %v720 = vpop.permute.xlu0 %719
      %v722 = vadd.f32 %v712, %v720
      %v723 = vtanh.pop %v722
      %725 = vrot.lane.b32.xlu0 %v723, 32
      %v726 = vpop.permute.xlu0 %725
      %v728 = vmul.f32 %v706, %v726
      %v729 = vpack.c.bf16 %v728, %v728
      %v730 = vsel %vm411, 1, 0
      %731 = vset.pattern.permute.xlu0 0
      %732 = vperm.xlu0 %731, %v730
      %v733 = vpop.permute.xlu0 %732
      %vm734 = vcmp.eq.s32.totalorder %v733, 1
      %vm735 = vmpackc.low %vm734, %vm734
      %v737 = vunpack.c.l.b16 %v572
      %v738 = vpack.c.b16 %v737, %v737
      %739 = vrot.lane.b32.xlu0 %v738, 64
      %v740 = vpop.permute.xlu0 %739
      %v742 = vsel %vm735, %v700, %v740
      %v743 = vsel %vm734, %v693, %v681
      %v744 = vsel %vm419, 1, 0
      %745 = vset.pattern.permute.xlu0 0
      %746 = vperm.xlu0 %745, %v744
      %v747 = vpop.permute.xlu0 %746
      %vm748 = vcmp.eq.s32.totalorder %v747, 1
      %vm749 = vmpackc.low %vm748, %vm748
      %750 = vrot.lane.b32.xlu0 %v578, 64
      %v751 = vpop.permute.xlu0 %750
      %v753 = vsel %vm749, %v729, %v751
      %v754 = vsel %vm748, %v722, %v710
      %756 = vrot.lane.b32.xlu0 %v742, 64
      %v757 = vpop.permute.xlu0 %756
      %759 = vrot.lane.b32.xlu0 %v753, 96
      %v760 = vpop.permute.xlu0 %759
      %v763 = vsel %vm498, %v757, %v760
      %v764 = vsel %vm624, %v763, 0
      %766 = vmatprep.subr.bf16.mxu0 %v609
      %767 = vmatpush1.bf16.msra.mxu0 %v608
      %768 = vmatprep.subr.bf16.mxu0 %v611
      %769 = vmatpush1.bf16.msra.mxu0 %v610
      %770 = vmatprep.subr.bf16.mxu0 %v613
      %771 = vmatpush1.bf16.msra.mxu0 %v612
      %772 = vmatprep.subr.bf16.mxu0 %v615
      %773 = vmatpush1.bf16.msra.mxu0 %v614
      %774 = vmatprep.subr.bf16.mxu0 0
      %775 = vmatpush1.bf16.msra.mxu0 0
      %776 = vmatprep.subr.bf16.mxu0 0
      %777 = vmatpush1.bf16.msra.mxu0 0
      %778 = vmatprep.subr.bf16.mxu0 0
      %779 = vmatpush1.bf16.msra.mxu0 0
      %780 = vmatprep.subr.bf16.mxu0 0
      %781 = vmatpush1.bf16.msra.mxu0 0
      %782 = vmatprep.subr.bf16.mxu0 0
      %783 = vmatpush1.bf16.msra.mxu0 0
      %784 = vmatprep.subr.bf16.mxu0 0
      %785 = vmatpush1.bf16.msra.mxu0 0
      %786 = vmatprep.subr.bf16.mxu0 0
      %787 = vmatpush1.bf16.msra.mxu0 0
      %788 = vmatprep.subr.bf16.mxu0 0
      %789 = vmatpush1.bf16.msra.mxu0 0
      %790 = vmatprep.subr.bf16.mxu0 0
      %791 = vmatpush1.bf16.msra.mxu0 0
      %792 = vmatprep.subr.bf16.mxu0 0
      %793 = vmatpush1.bf16.msra.mxu0 0
      %794 = vmatprep.subr.bf16.mxu0 0
      %795 = vmatpush1.bf16.msra.mxu0 0
      %796 = vmatprep.subr.bf16.mxu0 0
      %797 = vmatpush1.bf16.msra.mxu0 0
      %798 = vmatprep.mubr.bf16.mxu0 0
      %799 = vmatmul.mubr.bf16.gmra.mrb[0].mxu0 %v764
      %v800 = vpop.f32.mrb[0].mxu0
      %v801 = vadd.f32 0.0, %v800
      %v802 = vpop.f32.mrb[0].mxu0
      %v803 = vadd.f32 0.0, %v802
      %v804 = vpop.f32.mrb[0].mxu0
      %v805 = vpop.f32.mrb[0].mxu0
      %806 = vdwg.mxu0
      %v807 = vld [vmem:[#allocation6 + $0x10] sm:$0xff]
      %v808 = vadd.f32 %v801, %v807
      %v809 = vld [vmem:[#allocation6 + $0x28] sm:$0xff]
      %v810 = vadd.f32 %v803, %v809
      %v811 = vxor.u32 %v808, 2147483648
      %v812 = vmul.f32 %v811, 1.442695
      %v813 = vpow.pop %v812
      %v814 = vadd.f32 %v813, 1.0
      %v815 = vrcp.pop %v814
      %v816 = vmul.f32 1.0, %v815
      %v817 = vtanh.pop %v808
      %v818 = vmul.f32 %v816, %v743
      %820 = vrot.lane.b32.xlu0 %v817, 32
      %v821 = vpop.permute.xlu0 %820
      %v823 = vmul.f32 %v816, %v821
      %825 = vrot.lane.b32.xlu0 %v823, 32
      %v826 = vpop.permute.xlu0 %825
      %v828 = vadd.f32 %v818, %v826
      %v829 = vtanh.pop %v828
      %831 = vrot.lane.b32.xlu0 %v829, 32
      %v832 = vpop.permute.xlu0 %831
      %v834 = vmul.f32 %v816, %v832
      %v835 = vpack.c.bf16 %v834, %v834
      %v836 = vxor.u32 %v810, 2147483648
      %v837 = vmul.f32 %v836, 1.442695
      %v838 = vpow.pop %v837
      %v839 = vadd.f32 %v838, 1.0
      %v840 = vrcp.pop %v839
      %v841 = vmul.f32 1.0, %v840
      %v842 = vtanh.pop %v810
      %v843 = vmul.f32 %v841, %v754
      %845 = vrot.lane.b32.xlu0 %v842, 32
      %v846 = vpop.permute.xlu0 %845
      %v848 = vmul.f32 %v841, %v846
      %850 = vrot.lane.b32.xlu0 %v848, 32
      %v851 = vpop.permute.xlu0 %850
      %v853 = vadd.f32 %v843, %v851
      %v854 = vtanh.pop %v853
      %856 = vrot.lane.b32.xlu0 %v854, 32
      %v857 = vpop.permute.xlu0 %856
      %v859 = vmul.f32 %v841, %v857
      %v860 = vpack.c.bf16 %v859, %v859
      %v861 = vsel %vm412, 1, 0
      %862 = vset.pattern.permute.xlu0 0
      %863 = vperm.xlu0 %862, %v861
      %v864 = vpop.permute.xlu0 %863
      %vm865 = vcmp.eq.s32.totalorder %v864, 1
      %vm866 = vmpackc.low %vm865, %vm865
      %v867 = vsel %vm866, %v835, %v742
      %v868 = vsel %vm865, %v828, %v743
      %v869 = vsel %vm420, 1, 0
      %870 = vset.pattern.permute.xlu0 0
      %871 = vperm.xlu0 %870, %v869
      %v872 = vpop.permute.xlu0 %871
      %vm873 = vcmp.eq.s32.totalorder %v872, 1
      %vm874 = vmpackc.low %vm873, %vm873
      %v875 = vsel %vm874, %v860, %v753
      %v876 = vsel %vm873, %v853, %v754
      %878 = vrot.lane.b32.xlu0 %v867, 64
      %v879 = vpop.permute.xlu0 %878
      %881 = vrot.lane.b32.xlu0 %v875, 96
      %v882 = vpop.permute.xlu0 %881
      %v885 = vsel %vm498, %v879, %v882
      %v886 = vsel %vm624, %v885, 0
      %888 = vmatprep.subr.bf16.mxu0 %v609
      %889 = vmatpush1.bf16.msra.mxu0 %v608
      %890 = vmatprep.subr.bf16.mxu0 %v611
      %891 = vmatpush1.bf16.msra.mxu0 %v610
      %892 = vmatprep.subr.bf16.mxu0 %v613
      %893 = vmatpush1.bf16.msra.mxu0 %v612
      %894 = vmatprep.subr.bf16.mxu0 %v615
      %895 = vmatpush1.bf16.msra.mxu0 %v614
      %896 = vmatprep.subr.bf16.mxu0 0
      %897 = vmatpush1.bf16.msra.mxu0 0
      %898 = vmatprep.subr.bf16.mxu0 0
      %899 = vmatpush1.bf16.msra.mxu0 0
      %900 = vmatprep.subr.bf16.mxu0 0
      %901 = vmatpush1.bf16.msra.mxu0 0
      %902 = vmatprep.subr.bf16.mxu0 0
      %903 = vmatpush1.bf16.msra.mxu0 0
      %904 = vmatprep.subr.bf16.mxu0 0
      %905 = vmatpush1.bf16.msra.mxu0 0
      %906 = vmatprep.subr.bf16.mxu0 0
      %907 = vmatpush1.bf16.msra.mxu0 0
      %908 = vmatprep.subr.bf16.mxu0 0
      %909 = vmatpush1.bf16.msra.mxu0 0
      %910 = vmatprep.subr.bf16.mxu0 0
      %911 = vmatpush1.bf16.msra.mxu0 0
      %912 = vmatprep.subr.bf16.mxu0 0
      %913 = vmatpush1.bf16.msra.mxu0 0
      %914 = vmatprep.subr.bf16.mxu0 0
      %915 = vmatpush1.bf16.msra.mxu0 0
      %916 = vmatprep.subr.bf16.mxu0 0
      %917 = vmatpush1.bf16.msra.mxu0 0
      %918 = vmatprep.subr.bf16.mxu0 0
      %919 = vmatpush1.bf16.msra.mxu0 0
      %920 = vmatprep.mubr.bf16.mxu0 0
      %921 = vmatmul.mubr.bf16.gmra.mrb[0].mxu0 %v886
      %v922 = vpop.f32.mrb[0].mxu0
      %v923 = vadd.f32 0.0, %v922
      %v924 = vpop.f32.mrb[0].mxu0
      %v925 = vadd.f32 0.0, %v924
      %v926 = vpop.f32.mrb[0].mxu0
      %v927 = vpop.f32.mrb[0].mxu0
      %928 = vdwg.mxu0
      %v929 = vld [vmem:[#allocation6 + $0x20] sm:$0xff]
      %v930 = vadd.f32 %v923, %v929
      %v931 = vld [vmem:[#allocation6 + $0x18] sm:$0xff]
      %v932 = vadd.f32 %v925, %v931
      %v933 = vxor.u32 %v930, 2147483648
      %v934 = vmul.f32 %v933, 1.442695
      %v935 = vpow.pop %v934
      %v936 = vadd.f32 %v935, 1.0
      %v937 = vrcp.pop %v936
      %v938 = vmul.f32 1.0, %v937
      %v939 = vtanh.pop %v930
      %v940 = vmul.f32 %v938, %v868
      %942 = vrot.lane.b32.xlu0 %v939, 32
      %v943 = vpop.permute.xlu0 %942
      %v945 = vmul.f32 %v938, %v943
      %947 = vrot.lane.b32.xlu0 %v945, 32
      %v948 = vpop.permute.xlu0 %947
      %v950 = vadd.f32 %v940, %v948
      %v951 = vtanh.pop %v950
      %953 = vrot.lane.b32.xlu0 %v951, 32
      %v954 = vpop.permute.xlu0 %953
      %v956 = vmul.f32 %v938, %v954
      %v957 = vpack.c.bf16 %v956, %v956
      %v958 = vxor.u32 %v932, 2147483648
      %v959 = vmul.f32 %v958, 1.442695
      %v960 = vpow.pop %v959
      %v961 = vadd.f32 %v960, 1.0
      %v962 = vrcp.pop %v961
      %v963 = vmul.f32 1.0, %v962
      %v964 = vtanh.pop %v932
      %v965 = vmul.f32 %v963, %v876
      %967 = vrot.lane.b32.xlu0 %v964, 32
      %v968 = vpop.permute.xlu0 %967
      %v970 = vmul.f32 %v963, %v968
      %972 = vrot.lane.b32.xlu0 %v970, 32
      %v973 = vpop.permute.xlu0 %972
      %v975 = vadd.f32 %v965, %v973
      %v976 = vtanh.pop %v975
      %978 = vrot.lane.b32.xlu0 %v976, 32
      %v979 = vpop.permute.xlu0 %978
      %v981 = vmul.f32 %v963, %v979
      %v982 = vpack.c.bf16 %v981, %v981
      %v983 = vsel %vm413, 1, 0
      %984 = vset.pattern.permute.xlu0 0
      %985 = vperm.xlu0 %984, %v983
      %v986 = vpop.permute.xlu0 %985
      %vm987 = vcmp.eq.s32.totalorder %v986, 1
      %vm988 = vmpackc.low %vm987, %vm987
      %v989 = vsel %vm988, %v957, %v867
      %v990 = vsel %vm987, %v950, %v868
      %v991 = vsel %vm421, 1, 0
      %992 = vset.pattern.permute.xlu0 0
      %993 = vperm.xlu0 %992, %v991
      %v994 = vpop.permute.xlu0 %993
      %vm995 = vcmp.eq.s32.totalorder %v994, 1
      %vm996 = vmpackc.low %vm995, %vm995
      %v997 = vsel %vm996, %v982, %v875
      %v998 = vsel %vm995, %v975, %v876
      %1000 = vrot.lane.b32.xlu0 %v989, 64
      %v1001 = vpop.permute.xlu0 %1000
      %1003 = vrot.lane.b32.xlu0 %v997, 96
      %v1004 = vpop.permute.xlu0 %1003
      %v1007 = vsel %vm498, %v1001, %v1004
      %v1008 = vsel %vm624, %v1007, 0
      %1010 = vmatprep.subr.bf16.mxu0 %v609
      %1011 = vmatpush1.bf16.msra.mxu0 %v608
      %1012 = vmatprep.subr.bf16.mxu0 %v611
      %1013 = vmatpush1.bf16.msra.mxu0 %v610
      %1014 = vmatprep.subr.bf16.mxu0 %v613
      %1015 = vmatpush1.bf16.msra.mxu0 %v612
      %1016 = vmatprep.subr.bf16.mxu0 %v615
      %1017 = vmatpush1.bf16.msra.mxu0 %v614
      %1018 = vmatprep.subr.bf16.mxu0 0
      %1019 = vmatpush1.bf16.msra.mxu0 0
      %1020 = vmatprep.subr.bf16.mxu0 0
      %1021 = vmatpush1.bf16.msra.mxu0 0
      %1022 = vmatprep.subr.bf16.mxu0 0
      %1023 = vmatpush1.bf16.msra.mxu0 0
      %1024 = vmatprep.subr.bf16.mxu0 0
      %1025 = vmatpush1.bf16.msra.mxu0 0
      %1026 = vmatprep.subr.bf16.mxu0 0
      %1027 = vmatpush1.bf16.msra.mxu0 0
      %1028 = vmatprep.subr.bf16.mxu0 0
      %1029 = vmatpush1.bf16.msra.mxu0 0
      %1030 = vmatprep.subr.bf16.mxu0 0
      %1031 = vmatpush1.bf16.msra.mxu0 0
      %1032 = vmatprep.subr.bf16.mxu0 0
      %1033 = vmatpush1.bf16.msra.mxu0 0
      %1034 = vmatprep.subr.bf16.mxu0 0
      %1035 = vmatpush1.bf16.msra.mxu0 0
      %1036 = vmatprep.subr.bf16.mxu0 0
      %1037 = vmatpush1.bf16.msra.mxu0 0
      %1038 = vmatprep.subr.bf16.mxu0 0
      %1039 = vmatpush1.bf16.msra.mxu0 0
      %1040 = vmatprep.subr.bf16.mxu0 0
      %1041 = vmatpush1.bf16.msra.mxu0 0
      %1042 = vmatprep.mubr.bf16.mxu0 0
      %1043 = vmatmul.mubr.bf16.gmra.mrb[0].mxu0 %v1008
      %v1044 = vpop.f32.mrb[0].mxu0
      %v1045 = vadd.f32 0.0, %v1044
      %v1046 = vpop.f32.mrb[0].mxu0
      %v1047 = vadd.f32 0.0, %v1046
      %v1048 = vpop.f32.mrb[0].mxu0
      %v1049 = vpop.f32.mrb[0].mxu0
      %1050 = vdwg.mxu0
      %v1051 = vld [vmem:[#allocation6 + $0x30] sm:$0xff]
      %v1052 = vadd.f32 %v1045, %v1051
      %v1053 = vld [vmem:[#allocation6 + $0x8] sm:$0xff]
      %v1054 = vadd.f32 %v1047, %v1053
      %v1055 = vxor.u32 %v1052, 2147483648
      %v1056 = vmul.f32 %v1055, 1.442695
      %v1057 = vpow.pop %v1056
      %v1058 = vadd.f32 %v1057, 1.0
      %v1059 = vrcp.pop %v1058
      %v1060 = vmul.f32 1.0, %v1059
      %v1061 = vtanh.pop %v1052
      %v1062 = vmul.f32 %v1060, %v990
      %1064 = vrot.lane.b32.xlu0 %v1061, 32
      %v1065 = vpop.permute.xlu0 %1064
      %v1067 = vmul.f32 %v1060, %v1065
      %1069 = vrot.lane.b32.xlu0 %v1067, 32
      %v1070 = vpop.permute.xlu0 %1069
      %v1072 = vadd.f32 %v1062, %v1070
      %v1073 = vtanh.pop %v1072
      %1075 = vrot.lane.b32.xlu0 %v1073, 32
      %v1076 = vpop.permute.xlu0 %1075
      %v1078 = vmul.f32 %v1060, %v1076
      %v1079 = vpack.c.bf16 %v1078, %v1078
      %v1080 = vxor.u32 %v1054, 2147483648
      %v1081 = vmul.f32 %v1080, 1.442695
      %v1082 = vpow.pop %v1081
      %v1083 = vadd.f32 %v1082, 1.0
      %v1084 = vrcp.pop %v1083
      %v1085 = vmul.f32 1.0, %v1084
      %v1086 = vtanh.pop %v1054
      %v1087 = vmul.f32 %v1085, %v998
      %1089 = vrot.lane.b32.xlu0 %v1086, 32
      %v1090 = vpop.permute.xlu0 %1089
      %v1092 = vmul.f32 %v1085, %v1090
      %1094 = vrot.lane.b32.xlu0 %v1092, 32
      %v1095 = vpop.permute.xlu0 %1094
      %v1097 = vadd.f32 %v1087, %v1095
      %v1098 = vtanh.pop %v1097
      %1100 = vrot.lane.b32.xlu0 %v1098, 32
      %v1101 = vpop.permute.xlu0 %1100
      %v1103 = vmul.f32 %v1085, %v1101
      %v1104 = vpack.c.bf16 %v1103, %v1103
      %v1105 = vsel %vm414, 1, 0
      %1106 = vset.pattern.permute.xlu0 0
      %1107 = vperm.xlu0 %1106, %v1105
      %v1108 = vpop.permute.xlu0 %1107
      %vm1109 = vcmp.eq.s32.totalorder %v1108, 1
      %vm1110 = vmpackc.low %vm1109, %vm1109
      %v1111 = vsel %vm1110, %v1079, %v989
      %v1112 = vsel %vm1109, %v1072, %v990
      %v1113 = vsel %vm422, 1, 0
      %1114 = vset.pattern.permute.xlu0 0
      %1115 = vperm.xlu0 %1114, %v1113
      %v1116 = vpop.permute.xlu0 %1115
      %vm1117 = vcmp.eq.s32.totalorder %v1116, 1
      %vm1118 = vmpackc.low %vm1117, %vm1117
      %v1119 = vsel %vm1118, %v1104, %v997
      %v1120 = vsel %vm1117, %v1097, %v998
      %v1122 = vunpack.c.l.b16 %v1111
      %v1123 = vpack.c.b16 %v1122, %v1122
      %1124 = vrot.lane.b32.xlu0 %v1123, 64
      %v1125 = vpop.permute.xlu0 %1124
      %vm1127 = vcmask 257024
      %1128 = vst.msk [vmem:[#allocation2] sm:$0xf] %vm1127, %v1125
      %v1130 = vunpack.c.l.b16 %v1119
      %v1131 = vpack.c.b16 %v1130, %v1130
      %1132 = vrot.lane.b32.xlu0 %v1131, 64
      %v1133 = vpop.permute.xlu0 %1132
      %1135 = vst.msk [vmem:[#allocation3] sm:$0xf] %vm1127, %v1133
      %1137 = vrot.lane.b32.xlu0 %v1112, 96
      %v1138 = vpop.permute.xlu0 %1137
      %1140 = vst.msk [vmem:[#allocation4] sm:$0xff] %vm498, %v1138
      %1142 = vrot.lane.b32.xlu0 %v1120, 96
      %v1143 = vpop.permute.xlu0 %1142
      %1145 = vst.msk [vmem:[#allocation5] sm:$0xff] %vm498, %v1143
      %p1146 = scmp.eq.s32.totalorder %s26, 1
      // Predicated region
      $region57: #{bilstm_forward.1} parent=51 // pred_check
        %p1147 = pneg %p1146
      $region58: #{bilstm_forward.1} parent=51 // pred_check_branch
        %1149 = sbr.rel (%p1147) target = $region60
      $region59: #{bilstm_forward.1} parent=51 // pred_region
        %1150 = vrot.lane.b32.xlu0 %v1111, 64
        %v1151 = vpop.permute.xlu0 %1150
        %1152 = vrot.lane.b32.xlu0 %v1119, 96
        %v1153 = vpop.permute.xlu0 %1152
        %v1156 = vsel %vm498, %v1151, %v1153
        %v1158 = vunpack.c.l.bf16 %v1156
        %v1159 = vld [vmem:[%s6] sm:$0x1]
        %v1161 = vlaneseq
        %v1162 = vshrl.u32 %v1161, 7
        %v1163 = vsub.s32 0, %v1162
        %v1164 = vrot.slane %v1159, %v1163
        %v1166 = vmul.f32 %v1158, %v1164
        %v1167 = vsel %vm624, %v1166, 0.0
        %1168 = vadd.xlane.f32.xlu0 %v1167
        %v1169 = vpop.xlane.xlu0 %1168
        %v1170 = vld [vmem:[#allocation7] sm:$0x1]
        %v1172 = vlaneseq
        %v1173 = vshrl.u32 %v1172, 7
        %v1174 = vsub.s32 0, %v1173
        %v1175 = vrot.slane %v1170, %v1174
        %v1177 = vadd.f32 %v1169, %v1175
        %v1178 = vxor.u32 %v1177, 2147483648
        %v1179 = vmul.f32 %v1178, 1.442695
        %v1180 = vpow.pop %v1179
        %v1181 = vadd.f32 %v1180, 1.0
        %v1182 = vrcp.pop %v1181
        %v1183 = vmul.f32 1.0, %v1182
        %vm1184 = vcmask 7168
        %1185 = vst.msk [vmem:[%s393] sm:$0xff] %vm1184, %v1183
      $region60: #{bilstm_forward.1} parent=51 // pred_fallthru
        _
      %p1186 = scmp.lt.s32.totalorder %s25, 0
      %s1187 = scalar_select %p1186, %s25, 0
      %s1188 = smul.addr %s1187, 8
      %s1189 = scalar_lea.vmem %s8, %s1188
      // Predicated region
      $region61: #{bilstm_forward.1} parent=51 // pred_check
        %p1190 = pneg %p240
      $region62: #{bilstm_forward.1} parent=51 // pred_check_branch
        %1192 = sbr.rel (%p1190) target = $region64
      $region63: #{bilstm_forward.1} parent=51 // pred_region
        _
      $region64: #{bilstm_forward.1} parent=51 // pred_fallthru
        _
      // Predicated region
      $region65: #{bilstm_forward.1} parent=51 // pred_check
        %p1193 = pneg %p240
      $region66: #{bilstm_forward.1} parent=51 // pred_check_branch
        %1195 = sbr.rel (%p1193) target = $region68
      $region67: #{bilstm_forward.1} parent=51 // pred_region
        %p1196 = scmp.lt.s32.totalorder %s25, 0
        %s1197 = scalar_select %p1196, %s25, 0
        %s1198 = smul.addr %s1197, 8
        %s1199 = scalar_lea.vmem %s8, %s1198
      $region68: #{bilstm_forward.1} parent=51 // pred_fallthru
        _
    $region52: #{bilstm_forward.1} parent=5 // pred_fallthru
      _
    %p1200 = scmp.le.s32.totalorder 2, %s16
    // Predicated region
    $region69: #{bilstm_forward.1} parent=5 // pred_check
      %p1201 = pneg %p1200
    $region70: #{bilstm_forward.1} parent=5 // pred_check_branch
      %1203 = sbr.rel (%p1201) target = $region72
    $region71: #{bilstm_forward.1} parent=5 // pred_region
      %s1204 = ssub.s32 %s16, 2
    $region72: #{bilstm_forward.1} parent=5 // pred_fallthru
      _
  $region6: #{bilstm_forward.1} parent=0 // loop_footer
    %s20 = sadd.s32 1, %s16
  $region7: #{bilstm_forward.1} parent=0 // loop_footer_branch
    %15 = sbr.rel target = $region3
  $region8: #{bilstm_forward.1} parent=0 // loop_exit
    _

</llo_original>
